<compile_context>
chip_gen: v5e
topology: v5e:2x2
jax: 0.10.0
libtpu: 0.0.40
codegen_flags: <defaults>
</compile_context>

<pallas_src>
import jax
import jax.numpy as jnp
from jax.experimental import pallas as pl
from jax.experimental.pallas import tpu as pltpu

# ---- model hyperparameters (small, consistent with the module) -------------
VOCAB_SIZE = 512
EMBED_DIM = 32
LOCAL_WINDOW = 8          # local_window_size
HIDDEN_DIM = 128
NUM_BLOCKS = 2
BATCH = 8
LN_EPS = 1e-5             # PyTorch nn.LayerNorm default

MAX_TILE_B = 128              # max batch tile (MXU M dimension)
MATMUL_DTYPE = jnp.bfloat16   # MXU-native on v6e/v7x; accumulation stays f32


def _layer_norm(x, gamma, beta):
    # LayerNorm over last axis, population variance (PyTorch semantics).
    # One-pass variance: the two reductions are independent, so they pipeline
    # on the XLU instead of the serial centered form.
    mean = jnp.mean(x, axis=-1, keepdims=True)
    mean_sq = jnp.mean(x * x, axis=-1, keepdims=True)
    var = jnp.maximum(mean_sq - mean * mean, 0.0)
    return (x - mean) * jax.lax.rsqrt(var + LN_EPS) * gamma + beta


def nplm_kernel(tokens_ref,                 # [TILE_B, W]  int32
                emb_ref,                    # [V, E]       bf16
                w1_ref,                     # [W, E, H]    bf16
                b1_ref, g1_ref, be1_ref,    # [1, H]       f32
                wb_ref,                     # [NB, H, H]   bf16
                bb_ref, gb_ref, beb_ref,    # [NB, 1, H]   f32
                wf_ref,                     # [H, V]       bf16
                out_ref):                   # [TILE_B, V]  f32
    tokens = tokens_ref[...]
    tile_b = tokens.shape[0]

    # --- NPLMFirstBlock: fused embedding gather + first linear --------------
    # Gather each window position's embedding rows with an exact one-hot
    # matmul (0/1 in bf16 selects bf16 rows exactly), then feed the
    # [TILE_B, E] chunk straight into its W1 slice and accumulate in f32.
    vocab_ids = jax.lax.broadcasted_iota(jnp.int32, (1, VOCAB_SIZE), 1)
    acc = jnp.zeros((tile_b, HIDDEN_DIM), jnp.float32)
    for w in range(LOCAL_WINDOW):           # static unroll, W is small
        onehot = (tokens[:, w:w + 1] == vocab_ids).astype(MATMUL_DTYPE)
        emb_w = jnp.dot(onehot, emb_ref[...],
                        preferred_element_type=jnp.float32)        # [TILE_B, E]
        acc = acc + jnp.dot(emb_w.astype(MATMUL_DTYPE), w1_ref[w],
                            preferred_element_type=jnp.float32)    # [TILE_B, H]
    h = jnp.tanh(acc + b1_ref[...])
    h = _layer_norm(h, g1_ref[...], be1_ref[...])
    # dropout: identity in eval

    # --- NPLMBlock x NUM_BLOCKS (wrapped in F.relu by NPLM.forward) ----------
    for i in range(NUM_BLOCKS):             # static unroll, NUM_BLOCKS small
        t = jnp.tanh(jnp.dot(h.astype(MATMUL_DTYPE), wb_ref[i],
                             preferred_element_type=jnp.float32) + bb_ref[i])
        r = t + h                                   # residual
        n = _layer_norm(r, gb_ref[i], beb_ref[i])   # dropout: identity
        h = jnp.maximum(n, 0.0)                     # F.relu in NPLM.forward

    # --- NPLMFinalBlock: linear (no bias) + log_softmax ----------------------
    logits = jnp.dot(h.astype(MATMUL_DTYPE), wf_ref[...],
                     preferred_element_type=jnp.float32)
    m = jnp.max(logits, axis=-1, keepdims=True)
    s = logits - m
    lse = jnp.log(jnp.sum(jnp.exp(s), axis=-1, keepdims=True))
    out_ref[...] = s - lse


@jax.jit
def nplm_forward(tokens, params):
    b = tokens.shape[0]
    # Batch tile: multiple of 8 (sublane), capped at 128 (MXU M dimension).
    tile_b = min(MAX_TILE_B, pl.cdiv(b, 8) * 8)
    b_pad = pl.cdiv(b, tile_b) * tile_b
    if b_pad != b:
        # pad with token 0 (a valid row); padded outputs are sliced off below
        tokens = jnp.pad(tokens, ((0, b_pad - b), (0, 0)))
    grid = (b_pad // tile_b,)

    emb_bf = params["emb"].astype(MATMUL_DTYPE)
    w1_r = params["w1"].reshape(LOCAL_WINDOW, EMBED_DIM, HIDDEN_DIM)

    weight_2d = lambda i: (0, 0)      # VMEM-resident across all grid steps
    weight_3d = lambda i: (0, 0, 0)

    out = pl.pallas_call(
        nplm_kernel,
        grid=grid,
        in_specs=[
            pl.BlockSpec((tile_b, LOCAL_WINDOW), lambda i: (i, 0)),
            pl.BlockSpec((VOCAB_SIZE, EMBED_DIM), weight_2d),
            pl.BlockSpec((LOCAL_WINDOW, EMBED_DIM, HIDDEN_DIM), weight_3d),
            pl.BlockSpec((1, HIDDEN_DIM), weight_2d),
            pl.BlockSpec((1, HIDDEN_DIM), weight_2d),
            pl.BlockSpec((1, HIDDEN_DIM), weight_2d),
            pl.BlockSpec((NUM_BLOCKS, HIDDEN_DIM, HIDDEN_DIM), weight_3d),
            pl.BlockSpec((NUM_BLOCKS, 1, HIDDEN_DIM), weight_3d),
            pl.BlockSpec((NUM_BLOCKS, 1, HIDDEN_DIM), weight_3d),
            pl.BlockSpec((NUM_BLOCKS, 1, HIDDEN_DIM), weight_3d),
            pl.BlockSpec((HIDDEN_DIM, VOCAB_SIZE), weight_2d),
        ],
        out_specs=pl.BlockSpec((tile_b, VOCAB_SIZE), lambda i: (i, 0)),
        out_shape=jax.ShapeDtypeStruct((b_pad, VOCAB_SIZE), jnp.float32),
        compiler_params=pltpu.CompilerParams(
            dimension_semantics=("parallel",)),   # megacore sharding on v7x
    )(tokens, emb_bf, w1_r,
      params["b1"], params["g1"], params["be1"],
      params["wb"], params["bb"], params["gb"], params["beb"],
      params["wf"])
    return out[:b]


def make_params(key):
    ks = jax.random.split(key, 6)
    in_dim = LOCAL_WINDOW * EMBED_DIM
    return {
        "emb": jax.random.normal(ks[0], (VOCAB_SIZE, EMBED_DIM),
                                 jnp.float32) * 0.1,
        # Linear weights pre-transposed to [in, out], stored in the MXU dtype.
        "w1": (jax.random.normal(ks[1], (in_dim, HIDDEN_DIM), jnp.float32)
               * (1.0 / jnp.sqrt(in_dim))).astype(MATMUL_DTYPE),
        "b1": jax.random.normal(ks[2], (1, HIDDEN_DIM), jnp.float32) * 0.01,
        "g1": jnp.ones((1, HIDDEN_DIM), jnp.float32),
        "be1": jnp.zeros((1, HIDDEN_DIM), jnp.float32),
        "wb": (jax.random.normal(ks[3], (NUM_BLOCKS, HIDDEN_DIM, HIDDEN_DIM),
                                 jnp.float32)
               * (1.0 / jnp.sqrt(HIDDEN_DIM))).astype(MATMUL_DTYPE),
        "bb": jax.random.normal(ks[4], (NUM_BLOCKS, 1, HIDDEN_DIM),
                                jnp.float32) * 0.01,
        "gb": jnp.ones((NUM_BLOCKS, 1, HIDDEN_DIM), jnp.float32),
        "beb": jnp.zeros((NUM_BLOCKS, 1, HIDDEN_DIM), jnp.float32),
        "wf": (jax.random.normal(ks[5], (HIDDEN_DIM, VOCAB_SIZE), jnp.float32)
               * (1.0 / jnp.sqrt(HIDDEN_DIM))).astype(MATMUL_DTYPE),
    }


def nplm_reference(tokens, params):
    # Pure-JAX reference with matching precision (bf16 matmul operands,
    # f32 accumulation / elementwise) -- same math as the PyTorch module in
    # eval mode.
    embeds = params["emb"][tokens].reshape(tokens.shape[0], -1)
    h = jnp.tanh(jnp.dot(embeds.astype(MATMUL_DTYPE), params["w1"],
                         preferred_element_type=jnp.float32) + params["b1"])
    h = _layer_norm(h, params["g1"], params["be1"])
    for i in range(NUM_BLOCKS):
        t = jnp.tanh(jnp.dot(h.astype(MATMUL_DTYPE), params["wb"][i],
                             preferred_element_type=jnp.float32)
                     + params["bb"][i])
        h = jnp.maximum(_layer_norm(t + h, params["gb"][i], params["beb"][i]),
                        0.0)
    logits = jnp.dot(h.astype(MATMUL_DTYPE), params["wf"],
                     preferred_element_type=jnp.float32)
    return jax.nn.log_softmax(logits, axis=-1)


if __name__ == "__main__":
    key = jax.random.PRNGKey(0)
    pkey, tkey = jax.random.split(key)
    params = make_params(pkey)
    tokens = jax.random.randint(tkey, (BATCH, LOCAL_WINDOW), 0, VOCAB_SIZE,
                                dtype=jnp.int32)

    out = nplm_forward(tokens, params)
    out = jax.block_until_ready(out)

    ref = nplm_reference(tokens, params)
    assert out.shape == (BATCH, VOCAB_SIZE)
    assert jnp.max(jnp.abs(out - ref)) < 5e-3, "mismatch vs reference"

    print("KERNEL_OK")
</pallas_src>

<mosaic_0001>
module attributes {stable_mosaic.version = 11 : i64} {
  func.func @nplm_kernel(%arg0: i32, %arg1: memref<8x8xi32, #tpu.memory_space<vmem>>, %arg2: memref<512x32xbf16, #tpu.memory_space<vmem>>, %arg3: memref<8x32x128xbf16, #tpu.memory_space<vmem>>, %arg4: memref<1x128xf32, #tpu.memory_space<vmem>>, %arg5: memref<1x128xf32, #tpu.memory_space<vmem>>, %arg6: memref<1x128xf32, #tpu.memory_space<vmem>>, %arg7: memref<2x128x128xbf16, #tpu.memory_space<vmem>>, %arg8: memref<2x1x128xf32, #tpu.memory_space<vmem>>, %arg9: memref<2x1x128xf32, #tpu.memory_space<vmem>>, %arg10: memref<2x1x128xf32, #tpu.memory_space<vmem>>, %arg11: memref<128x512xbf16, #tpu.memory_space<vmem>>, %arg12: memref<8x512xf32, #tpu.memory_space<vmem>>) attributes {dimension_semantics = [#tpu.dimension_semantics<parallel>], iteration_bounds = array<i64: 1>, scalar_prefetch = 0 : i64, scratch_operands = 0 : i64, tpu.core_type = #tpu.core_type<tc>, window_params = [{transform_indices = @transform_0, window_bounds = array<i64: 8, 8>}, {pipeline_mode = #tpu.pipeline_mode<synchronous>, transform_indices = @transform_1, window_bounds = array<i64: 512, 32>}, {pipeline_mode = #tpu.pipeline_mode<synchronous>, transform_indices = @transform_2, window_bounds = array<i64: 8, 32, 128>}, {pipeline_mode = #tpu.pipeline_mode<synchronous>, transform_indices = @transform_3, window_bounds = array<i64: 1, 128>}, {pipeline_mode = #tpu.pipeline_mode<synchronous>, transform_indices = @transform_4, window_bounds = array<i64: 1, 128>}, {pipeline_mode = #tpu.pipeline_mode<synchronous>, transform_indices = @transform_5, window_bounds = array<i64: 1, 128>}, {pipeline_mode = #tpu.pipeline_mode<synchronous>, transform_indices = @transform_6, window_bounds = array<i64: 2, 128, 128>}, {pipeline_mode = #tpu.pipeline_mode<synchronous>, transform_indices = @transform_7, window_bounds = array<i64: 2, 1, 128>}, {pipeline_mode = #tpu.pipeline_mode<synchronous>, transform_indices = @transform_8, window_bounds = array<i64: 2, 1, 128>}, {pipeline_mode = #tpu.pipeline_mode<synchronous>, transform_indices = @transform_9, window_bounds = array<i64: 2, 1, 128>}, {pipeline_mode = #tpu.pipeline_mode<synchronous>, transform_indices = @transform_10, window_bounds = array<i64: 128, 512>}, {transform_indices = @transform_11, window_bounds = array<i64: 8, 512>}]} {
    %c0 = arith.constant 0 : index
    %c0_0 = arith.constant 0 : index
    %0 = vector.load %arg1[%c0, %c0_0] : memref<8x8xi32, #tpu.memory_space<vmem>>, vector<8x8xi32>
    %1 = tpu.iota {dimensions = array<i32: 1>} : vector<1x512xi32>
    %cst = arith.constant 0.000000e+00 : f32
    %2 = vector.broadcast %cst : f32 to vector<8x128xf32>
    %3 = vector.extract_strided_slice %0 {offsets = [0, 0], sizes = [8, 1], strides = [1, 1]} : vector<8x8xi32> to vector<8x1xi32>
    %4 = vector.broadcast %3 : vector<8x1xi32> to vector<8x512xi32>
    %5 = vector.broadcast %1 : vector<1x512xi32> to vector<8x512xi32>
    %6 = arith.cmpi eq, %4, %5 : vector<8x512xi32>
    %7 = arith.extui %6 : vector<8x512xi1> to vector<8x512xi32>
    %8 = arith.sitofp %7 : vector<8x512xi32> to vector<8x512xf32>
    %9 = arith.truncf %8 : vector<8x512xf32> to vector<8x512xbf16>
    %c0_1 = arith.constant 0 : index
    %c0_2 = arith.constant 0 : index
    %10 = vector.load %arg2[%c0_1, %c0_2] : memref<512x32xbf16, #tpu.memory_space<vmem>>, vector<512x32xbf16>
    %cst_3 = arith.constant dense<0.000000e+00> : vector<8x32xf32>
    %11 = tpu.matmul %9, %10, %cst_3 {dimension_numbers = #tpu.dot_dimension_numbers<[1], [0], [0], [1], [0, 0, 1, 1], [], []>} : vector<8x512xbf16>, vector<512x32xbf16>, vector<8x32xf32> -> vector<8x32xf32>
    %12 = arith.truncf %11 : vector<8x32xf32> to vector<8x32xbf16>
    %c0_4 = arith.constant 0 : index
    %c0_5 = arith.constant 0 : index
    %c0_6 = arith.constant 0 : index
    %13 = vector.load %arg3[%c0_4, %c0_5, %c0_6] : memref<8x32x128xbf16, #tpu.memory_space<vmem>>, vector<1x32x128xbf16>
    %14 = vector.shape_cast %13 : vector<1x32x128xbf16> to vector<32x128xbf16>
    %cst_7 = arith.constant dense<0.000000e+00> : vector<8x128xf32>
    %15 = tpu.matmul %12, %14, %cst_7 {dimension_numbers = #tpu.dot_dimension_numbers<[1], [0], [0], [1], [0, 0, 1, 1], [], []>} : vector<8x32xbf16>, vector<32x128xbf16>, vector<8x128xf32> -> vector<8x128xf32>
    %16 = arith.addf %2, %15 : vector<8x128xf32>
    %17 = vector.extract_strided_slice %0 {offsets = [0, 1], sizes = [8, 1], strides = [1, 1]} : vector<8x8xi32> to vector<8x1xi32>
    %18 = vector.broadcast %17 : vector<8x1xi32> to vector<8x512xi32>
    %19 = vector.broadcast %1 : vector<1x512xi32> to vector<8x512xi32>
    %20 = arith.cmpi eq, %18, %19 : vector<8x512xi32>
    %21 = arith.extui %20 : vector<8x512xi1> to vector<8x512xi32>
    %22 = arith.sitofp %21 : vector<8x512xi32> to vector<8x512xf32>
    %23 = arith.truncf %22 : vector<8x512xf32> to vector<8x512xbf16>
    %c0_8 = arith.constant 0 : index
    %c0_9 = arith.constant 0 : index
    %24 = vector.load %arg2[%c0_8, %c0_9] : memref<512x32xbf16, #tpu.memory_space<vmem>>, vector<512x32xbf16>
    %cst_10 = arith.constant dense<0.000000e+00> : vector<8x32xf32>
    %25 = tpu.matmul %23, %24, %cst_10 {dimension_numbers = #tpu.dot_dimension_numbers<[1], [0], [0], [1], [0, 0, 1, 1], [], []>} : vector<8x512xbf16>, vector<512x32xbf16>, vector<8x32xf32> -> vector<8x32xf32>
    %26 = arith.truncf %25 : vector<8x32xf32> to vector<8x32xbf16>
    %c1 = arith.constant 1 : index
    %c0_11 = arith.constant 0 : index
    %c0_12 = arith.constant 0 : index
    %27 = vector.load %arg3[%c1, %c0_11, %c0_12] : memref<8x32x128xbf16, #tpu.memory_space<vmem>>, vector<1x32x128xbf16>
    %28 = vector.shape_cast %27 : vector<1x32x128xbf16> to vector<32x128xbf16>
    %cst_13 = arith.constant dense<0.000000e+00> : vector<8x128xf32>
    %29 = tpu.matmul %26, %28, %cst_13 {dimension_numbers = #tpu.dot_dimension_numbers<[1], [0], [0], [1], [0, 0, 1, 1], [], []>} : vector<8x32xbf16>, vector<32x128xbf16>, vector<8x128xf32> -> vector<8x128xf32>
    %30 = arith.addf %16, %29 : vector<8x128xf32>
    %31 = vector.extract_strided_slice %0 {offsets = [0, 2], sizes = [8, 1], strides = [1, 1]} : vector<8x8xi32> to vector<8x1xi32>
    %32 = vector.broadcast %31 : vector<8x1xi32> to vector<8x512xi32>
    %33 = vector.broadcast %1 : vector<1x512xi32> to vector<8x512xi32>
    %34 = arith.cmpi eq, %32, %33 : vector<8x512xi32>
    %35 = arith.extui %34 : vector<8x512xi1> to vector<8x512xi32>
    %36 = arith.sitofp %35 : vector<8x512xi32> to vector<8x512xf32>
    %37 = arith.truncf %36 : vector<8x512xf32> to vector<8x512xbf16>
    %c0_14 = arith.constant 0 : index
    %c0_15 = arith.constant 0 : index
    %38 = vector.load %arg2[%c0_14, %c0_15] : memref<512x32xbf16, #tpu.memory_space<vmem>>, vector<512x32xbf16>
    %cst_16 = arith.constant dense<0.000000e+00> : vector<8x32xf32>
    %39 = tpu.matmul %37, %38, %cst_16 {dimension_numbers = #tpu.dot_dimension_numbers<[1], [0], [0], [1], [0, 0, 1, 1], [], []>} : vector<8x512xbf16>, vector<512x32xbf16>, vector<8x32xf32> -> vector<8x32xf32>
    %40 = arith.truncf %39 : vector<8x32xf32> to vector<8x32xbf16>
    %c2 = arith.constant 2 : index
    %c0_17 = arith.constant 0 : index
    %c0_18 = arith.constant 0 : index
    %41 = vector.load %arg3[%c2, %c0_17, %c0_18] : memref<8x32x128xbf16, #tpu.memory_space<vmem>>, vector<1x32x128xbf16>
    %42 = vector.shape_cast %41 : vector<1x32x128xbf16> to vector<32x128xbf16>
    %cst_19 = arith.constant dense<0.000000e+00> : vector<8x128xf32>
    %43 = tpu.matmul %40, %42, %cst_19 {dimension_numbers = #tpu.dot_dimension_numbers<[1], [0], [0], [1], [0, 0, 1, 1], [], []>} : vector<8x32xbf16>, vector<32x128xbf16>, vector<8x128xf32> -> vector<8x128xf32>
    %44 = arith.addf %30, %43 : vector<8x128xf32>
    %45 = vector.extract_strided_slice %0 {offsets = [0, 3], sizes = [8, 1], strides = [1, 1]} : vector<8x8xi32> to vector<8x1xi32>
    %46 = vector.broadcast %45 : vector<8x1xi32> to vector<8x512xi32>
    %47 = vector.broadcast %1 : vector<1x512xi32> to vector<8x512xi32>
    %48 = arith.cmpi eq, %46, %47 : vector<8x512xi32>
    %49 = arith.extui %48 : vector<8x512xi1> to vector<8x512xi32>
    %50 = arith.sitofp %49 : vector<8x512xi32> to vector<8x512xf32>
    %51 = arith.truncf %50 : vector<8x512xf32> to vector<8x512xbf16>
    %c0_20 = arith.constant 0 : index
    %c0_21 = arith.constant 0 : index
    %52 = vector.load %arg2[%c0_20, %c0_21] : memref<512x32xbf16, #tpu.memory_space<vmem>>, vector<512x32xbf16>
    %cst_22 = arith.constant dense<0.000000e+00> : vector<8x32xf32>
    %53 = tpu.matmul %51, %52, %cst_22 {dimension_numbers = #tpu.dot_dimension_numbers<[1], [0], [0], [1], [0, 0, 1, 1], [], []>} : vector<8x512xbf16>, vector<512x32xbf16>, vector<8x32xf32> -> vector<8x32xf32>
    %54 = arith.truncf %53 : vector<8x32xf32> to vector<8x32xbf16>
    %c3 = arith.constant 3 : index
    %c0_23 = arith.constant 0 : index
    %c0_24 = arith.constant 0 : index
    %55 = vector.load %arg3[%c3, %c0_23, %c0_24] : memref<8x32x128xbf16, #tpu.memory_space<vmem>>, vector<1x32x128xbf16>
    %56 = vector.shape_cast %55 : vector<1x32x128xbf16> to vector<32x128xbf16>
    %cst_25 = arith.constant dense<0.000000e+00> : vector<8x128xf32>
    %57 = tpu.matmul %54, %56, %cst_25 {dimension_numbers = #tpu.dot_dimension_numbers<[1], [0], [0], [1], [0, 0, 1, 1], [], []>} : vector<8x32xbf16>, vector<32x128xbf16>, vector<8x128xf32> -> vector<8x128xf32>
    %58 = arith.addf %44, %57 : vector<8x128xf32>
    %59 = vector.extract_strided_slice %0 {offsets = [0, 4], sizes = [8, 1], strides = [1, 1]} : vector<8x8xi32> to vector<8x1xi32>
    %60 = vector.broadcast %59 : vector<8x1xi32> to vector<8x512xi32>
    %61 = vector.broadcast %1 : vector<1x512xi32> to vector<8x512xi32>
    %62 = arith.cmpi eq, %60, %61 : vector<8x512xi32>
    %63 = arith.extui %62 : vector<8x512xi1> to vector<8x512xi32>
    %64 = arith.sitofp %63 : vector<8x512xi32> to vector<8x512xf32>
    %65 = arith.truncf %64 : vector<8x512xf32> to vector<8x512xbf16>
    %c0_26 = arith.constant 0 : index
    %c0_27 = arith.constant 0 : index
    %66 = vector.load %arg2[%c0_26, %c0_27] : memref<512x32xbf16, #tpu.memory_space<vmem>>, vector<512x32xbf16>
    %cst_28 = arith.constant dense<0.000000e+00> : vector<8x32xf32>
    %67 = tpu.matmul %65, %66, %cst_28 {dimension_numbers = #tpu.dot_dimension_numbers<[1], [0], [0], [1], [0, 0, 1, 1], [], []>} : vector<8x512xbf16>, vector<512x32xbf16>, vector<8x32xf32> -> vector<8x32xf32>
    %68 = arith.truncf %67 : vector<8x32xf32> to vector<8x32xbf16>
    %c4 = arith.constant 4 : index
    %c0_29 = arith.constant 0 : index
    %c0_30 = arith.constant 0 : index
    %69 = vector.load %arg3[%c4, %c0_29, %c0_30] : memref<8x32x128xbf16, #tpu.memory_space<vmem>>, vector<1x32x128xbf16>
    %70 = vector.shape_cast %69 : vector<1x32x128xbf16> to vector<32x128xbf16>
    %cst_31 = arith.constant dense<0.000000e+00> : vector<8x128xf32>
    %71 = tpu.matmul %68, %70, %cst_31 {dimension_numbers = #tpu.dot_dimension_numbers<[1], [0], [0], [1], [0, 0, 1, 1], [], []>} : vector<8x32xbf16>, vector<32x128xbf16>, vector<8x128xf32> -> vector<8x128xf32>
    %72 = arith.addf %58, %71 : vector<8x128xf32>
    %73 = vector.extract_strided_slice %0 {offsets = [0, 5], sizes = [8, 1], strides = [1, 1]} : vector<8x8xi32> to vector<8x1xi32>
    %74 = vector.broadcast %73 : vector<8x1xi32> to vector<8x512xi32>
    %75 = vector.broadcast %1 : vector<1x512xi32> to vector<8x512xi32>
    %76 = arith.cmpi eq, %74, %75 : vector<8x512xi32>
    %77 = arith.extui %76 : vector<8x512xi1> to vector<8x512xi32>
    %78 = arith.sitofp %77 : vector<8x512xi32> to vector<8x512xf32>
    %79 = arith.truncf %78 : vector<8x512xf32> to vector<8x512xbf16>
    %c0_32 = arith.constant 0 : index
    %c0_33 = arith.constant 0 : index
    %80 = vector.load %arg2[%c0_32, %c0_33] : memref<512x32xbf16, #tpu.memory_space<vmem>>, vector<512x32xbf16>
    %cst_34 = arith.constant dense<0.000000e+00> : vector<8x32xf32>
    %81 = tpu.matmul %79, %80, %cst_34 {dimension_numbers = #tpu.dot_dimension_numbers<[1], [0], [0], [1], [0, 0, 1, 1], [], []>} : vector<8x512xbf16>, vector<512x32xbf16>, vector<8x32xf32> -> vector<8x32xf32>
    %82 = arith.truncf %81 : vector<8x32xf32> to vector<8x32xbf16>
    %c5 = arith.constant 5 : index
    %c0_35 = arith.constant 0 : index
    %c0_36 = arith.constant 0 : index
    %83 = vector.load %arg3[%c5, %c0_35, %c0_36] : memref<8x32x128xbf16, #tpu.memory_space<vmem>>, vector<1x32x128xbf16>
    %84 = vector.shape_cast %83 : vector<1x32x128xbf16> to vector<32x128xbf16>
    %cst_37 = arith.constant dense<0.000000e+00> : vector<8x128xf32>
    %85 = tpu.matmul %82, %84, %cst_37 {dimension_numbers = #tpu.dot_dimension_numbers<[1], [0], [0], [1], [0, 0, 1, 1], [], []>} : vector<8x32xbf16>, vector<32x128xbf16>, vector<8x128xf32> -> vector<8x128xf32>
    %86 = arith.addf %72, %85 : vector<8x128xf32>
    %87 = vector.extract_strided_slice %0 {offsets = [0, 6], sizes = [8, 1], strides = [1, 1]} : vector<8x8xi32> to vector<8x1xi32>
    %88 = vector.broadcast %87 : vector<8x1xi32> to vector<8x512xi32>
    %89 = vector.broadcast %1 : vector<1x512xi32> to vector<8x512xi32>
    %90 = arith.cmpi eq, %88, %89 : vector<8x512xi32>
    %91 = arith.extui %90 : vector<8x512xi1> to vector<8x512xi32>
    %92 = arith.sitofp %91 : vector<8x512xi32> to vector<8x512xf32>
    %93 = arith.truncf %92 : vector<8x512xf32> to vector<8x512xbf16>
    %c0_38 = arith.constant 0 : index
    %c0_39 = arith.constant 0 : index
    %94 = vector.load %arg2[%c0_38, %c0_39] : memref<512x32xbf16, #tpu.memory_space<vmem>>, vector<512x32xbf16>
    %cst_40 = arith.constant dense<0.000000e+00> : vector<8x32xf32>
    %95 = tpu.matmul %93, %94, %cst_40 {dimension_numbers = #tpu.dot_dimension_numbers<[1], [0], [0], [1], [0, 0, 1, 1], [], []>} : vector<8x512xbf16>, vector<512x32xbf16>, vector<8x32xf32> -> vector<8x32xf32>
    %96 = arith.truncf %95 : vector<8x32xf32> to vector<8x32xbf16>
    %c6 = arith.constant 6 : index
    %c0_41 = arith.constant 0 : index
    %c0_42 = arith.constant 0 : index
    %97 = vector.load %arg3[%c6, %c0_41, %c0_42] : memref<8x32x128xbf16, #tpu.memory_space<vmem>>, vector<1x32x128xbf16>
    %98 = vector.shape_cast %97 : vector<1x32x128xbf16> to vector<32x128xbf16>
    %cst_43 = arith.constant dense<0.000000e+00> : vector<8x128xf32>
    %99 = tpu.matmul %96, %98, %cst_43 {dimension_numbers = #tpu.dot_dimension_numbers<[1], [0], [0], [1], [0, 0, 1, 1], [], []>} : vector<8x32xbf16>, vector<32x128xbf16>, vector<8x128xf32> -> vector<8x128xf32>
    %100 = arith.addf %86, %99 : vector<8x128xf32>
    %101 = vector.extract_strided_slice %0 {offsets = [0, 7], sizes = [8, 1], strides = [1, 1]} : vector<8x8xi32> to vector<8x1xi32>
    %102 = vector.broadcast %101 : vector<8x1xi32> to vector<8x512xi32>
    %103 = vector.broadcast %1 : vector<1x512xi32> to vector<8x512xi32>
    %104 = arith.cmpi eq, %102, %103 : vector<8x512xi32>
    %105 = arith.extui %104 : vector<8x512xi1> to vector<8x512xi32>
    %106 = arith.sitofp %105 : vector<8x512xi32> to vector<8x512xf32>
    %107 = arith.truncf %106 : vector<8x512xf32> to vector<8x512xbf16>
    %c0_44 = arith.constant 0 : index
    %c0_45 = arith.constant 0 : index
    %108 = vector.load %arg2[%c0_44, %c0_45] : memref<512x32xbf16, #tpu.memory_space<vmem>>, vector<512x32xbf16>
    %cst_46 = arith.constant dense<0.000000e+00> : vector<8x32xf32>
    %109 = tpu.matmul %107, %108, %cst_46 {dimension_numbers = #tpu.dot_dimension_numbers<[1], [0], [0], [1], [0, 0, 1, 1], [], []>} : vector<8x512xbf16>, vector<512x32xbf16>, vector<8x32xf32> -> vector<8x32xf32>
    %110 = arith.truncf %109 : vector<8x32xf32> to vector<8x32xbf16>
    %c7 = arith.constant 7 : index
    %c0_47 = arith.constant 0 : index
    %c0_48 = arith.constant 0 : index
    %111 = vector.load %arg3[%c7, %c0_47, %c0_48] : memref<8x32x128xbf16, #tpu.memory_space<vmem>>, vector<1x32x128xbf16>
    %112 = vector.shape_cast %111 : vector<1x32x128xbf16> to vector<32x128xbf16>
    %cst_49 = arith.constant dense<0.000000e+00> : vector<8x128xf32>
    %113 = tpu.matmul %110, %112, %cst_49 {dimension_numbers = #tpu.dot_dimension_numbers<[1], [0], [0], [1], [0, 0, 1, 1], [], []>} : vector<8x32xbf16>, vector<32x128xbf16>, vector<8x128xf32> -> vector<8x128xf32>
    %114 = arith.addf %100, %113 : vector<8x128xf32>
    %c0_50 = arith.constant 0 : index
    %c0_51 = arith.constant 0 : index
    %115 = vector.load %arg4[%c0_50, %c0_51] : memref<1x128xf32, #tpu.memory_space<vmem>>, vector<1x128xf32>
    %116 = vector.broadcast %115 : vector<1x128xf32> to vector<8x128xf32>
    %117 = arith.addf %114, %116 : vector<8x128xf32>
    %118 = math.tanh %117 : vector<8x128xf32>
    %c0_52 = arith.constant 0 : index
    %c0_53 = arith.constant 0 : index
    %119 = vector.load %arg5[%c0_52, %c0_53] : memref<1x128xf32, #tpu.memory_space<vmem>>, vector<1x128xf32>
    %c0_54 = arith.constant 0 : index
    %c0_55 = arith.constant 0 : index
    %120 = vector.load %arg6[%c0_54, %c0_55] : memref<1x128xf32, #tpu.memory_space<vmem>>, vector<1x128xf32>
    %cst_56 = arith.constant dense<0.000000e+00> : vector<8xf32>
    %121 = vector.multi_reduction <add>, %118, %cst_56 [1] : vector<8x128xf32> to vector<8xf32>
    %122 = vector.shape_cast %121 : vector<8xf32> to vector<8x1xf32>
    %cst_57 = arith.constant 1.280000e+02 : f32
    %123 = vector.broadcast %cst_57 : f32 to vector<8x1xf32>
    %124 = arith.divf %122, %123 : vector<8x1xf32>
    %125 = arith.mulf %118, %118 : vector<8x128xf32>
    %cst_58 = arith.constant dense<0.000000e+00> : vector<8xf32>
    %126 = vector.multi_reduction <add>, %125, %cst_58 [1] : vector<8x128xf32> to vector<8xf32>
    %127 = vector.shape_cast %126 : vector<8xf32> to vector<8x1xf32>
    %cst_59 = arith.constant 1.280000e+02 : f32
    %128 = vector.broadcast %cst_59 : f32 to vector<8x1xf32>
    %129 = arith.divf %127, %128 : vector<8x1xf32>
    %130 = arith.mulf %124, %124 : vector<8x1xf32>
    %131 = arith.subf %129, %130 : vector<8x1xf32>
    %cst_60 = arith.constant 0.000000e+00 : f32
    %132 = vector.broadcast %cst_60 : f32 to vector<8x1xf32>
    %133 = arith.maximumf %131, %132 : vector<8x1xf32>
    %134 = vector.broadcast %124 : vector<8x1xf32> to vector<8x128xf32>
    %135 = arith.subf %118, %134 : vector<8x128xf32>
    %cst_61 = arith.constant 9.99999974E-6 : f32
    %136 = vector.broadcast %cst_61 : f32 to vector<8x1xf32>
    %137 = arith.addf %133, %136 : vector<8x1xf32>
    %138 = math.rsqrt %137 : vector<8x1xf32>
    %139 = vector.broadcast %138 : vector<8x1xf32> to vector<8x128xf32>
    %140 = arith.mulf %135, %139 : vector<8x128xf32>
    %141 = vector.broadcast %119 : vector<1x128xf32> to vector<8x128xf32>
    %142 = arith.mulf %140, %141 : vector<8x128xf32>
    %143 = vector.broadcast %120 : vector<1x128xf32> to vector<8x128xf32>
    %144 = arith.addf %142, %143 : vector<8x128xf32>
    %145 = arith.truncf %144 : vector<8x128xf32> to vector<8x128xbf16>
    %c0_62 = arith.constant 0 : index
    %c0_63 = arith.constant 0 : index
    %c0_64 = arith.constant 0 : index
    %146 = vector.load %arg7[%c0_62, %c0_63, %c0_64] : memref<2x128x128xbf16, #tpu.memory_space<vmem>>, vector<1x128x128xbf16>
    %147 = vector.shape_cast %146 : vector<1x128x128xbf16> to vector<128x128xbf16>
    %cst_65 = arith.constant dense<0.000000e+00> : vector<8x128xf32>
    %148 = tpu.matmul %145, %147, %cst_65 {dimension_numbers = #tpu.dot_dimension_numbers<[1], [0], [0], [1], [0, 0, 1, 1], [], []>} : vector<8x128xbf16>, vector<128x128xbf16>, vector<8x128xf32> -> vector<8x128xf32>
    %c0_66 = arith.constant 0 : index
    %c0_67 = arith.constant 0 : index
    %c0_68 = arith.constant 0 : index
    %149 = vector.load %arg8[%c0_66, %c0_67, %c0_68] : memref<2x1x128xf32, #tpu.memory_space<vmem>>, vector<1x1x128xf32>
    %150 = vector.shape_cast %149 : vector<1x1x128xf32> to vector<1x128xf32>
    %151 = vector.broadcast %150 : vector<1x128xf32> to vector<8x128xf32>
    %152 = arith.addf %148, %151 : vector<8x128xf32>
    %153 = math.tanh %152 : vector<8x128xf32>
    %154 = arith.addf %153, %144 : vector<8x128xf32>
    %c0_69 = arith.constant 0 : index
    %c0_70 = arith.constant 0 : index
    %c0_71 = arith.constant 0 : index
    %155 = vector.load %arg9[%c0_69, %c0_70, %c0_71] : memref<2x1x128xf32, #tpu.memory_space<vmem>>, vector<1x1x128xf32>
    %156 = vector.shape_cast %155 : vector<1x1x128xf32> to vector<1x128xf32>
    %c0_72 = arith.constant 0 : index
    %c0_73 = arith.constant 0 : index
    %c0_74 = arith.constant 0 : index
    %157 = vector.load %arg10[%c0_72, %c0_73, %c0_74] : memref<2x1x128xf32, #tpu.memory_space<vmem>>, vector<1x1x128xf32>
    %158 = vector.shape_cast %157 : vector<1x1x128xf32> to vector<1x128xf32>
    %cst_75 = arith.constant dense<0.000000e+00> : vector<8xf32>
    %159 = vector.multi_reduction <add>, %154, %cst_75 [1] : vector<8x128xf32> to vector<8xf32>
    %160 = vector.shape_cast %159 : vector<8xf32> to vector<8x1xf32>
    %cst_76 = arith.constant 1.280000e+02 : f32
    %161 = vector.broadcast %cst_76 : f32 to vector<8x1xf32>
    %162 = arith.divf %160, %161 : vector<8x1xf32>
    %163 = arith.mulf %154, %154 : vector<8x128xf32>
    %cst_77 = arith.constant dense<0.000000e+00> : vector<8xf32>
    %164 = vector.multi_reduction <add>, %163, %cst_77 [1] : vector<8x128xf32> to vector<8xf32>
    %165 = vector.shape_cast %164 : vector<8xf32> to vector<8x1xf32>
    %cst_78 = arith.constant 1.280000e+02 : f32
    %166 = vector.broadcast %cst_78 : f32 to vector<8x1xf32>
    %167 = arith.divf %165, %166 : vector<8x1xf32>
    %168 = arith.mulf %162, %162 : vector<8x1xf32>
    %169 = arith.subf %167, %168 : vector<8x1xf32>
    %cst_79 = arith.constant 0.000000e+00 : f32
    %170 = vector.broadcast %cst_79 : f32 to vector<8x1xf32>
    %171 = arith.maximumf %169, %170 : vector<8x1xf32>
    %172 = vector.broadcast %162 : vector<8x1xf32> to vector<8x128xf32>
    %173 = arith.subf %154, %172 : vector<8x128xf32>
    %cst_80 = arith.constant 9.99999974E-6 : f32
    %174 = vector.broadcast %cst_80 : f32 to vector<8x1xf32>
    %175 = arith.addf %171, %174 : vector<8x1xf32>
    %176 = math.rsqrt %175 : vector<8x1xf32>
    %177 = vector.broadcast %176 : vector<8x1xf32> to vector<8x128xf32>
    %178 = arith.mulf %173, %177 : vector<8x128xf32>
    %179 = vector.broadcast %156 : vector<1x128xf32> to vector<8x128xf32>
    %180 = arith.mulf %178, %179 : vector<8x128xf32>
    %181 = vector.broadcast %158 : vector<1x128xf32> to vector<8x128xf32>
    %182 = arith.addf %180, %181 : vector<8x128xf32>
    %cst_81 = arith.constant 0.000000e+00 : f32
    %183 = vector.broadcast %cst_81 : f32 to vector<8x128xf32>
    %184 = arith.maximumf %182, %183 : vector<8x128xf32>
    %185 = arith.truncf %184 : vector<8x128xf32> to vector<8x128xbf16>
    %c1_82 = arith.constant 1 : index
    %c0_83 = arith.constant 0 : index
    %c0_84 = arith.constant 0 : index
    %186 = vector.load %arg7[%c1_82, %c0_83, %c0_84] : memref<2x128x128xbf16, #tpu.memory_space<vmem>>, vector<1x128x128xbf16>
    %187 = vector.shape_cast %186 : vector<1x128x128xbf16> to vector<128x128xbf16>
    %cst_85 = arith.constant dense<0.000000e+00> : vector<8x128xf32>
    %188 = tpu.matmul %185, %187, %cst_85 {dimension_numbers = #tpu.dot_dimension_numbers<[1], [0], [0], [1], [0, 0, 1, 1], [], []>} : vector<8x128xbf16>, vector<128x128xbf16>, vector<8x128xf32> -> vector<8x128xf32>
    %c1_86 = arith.constant 1 : index
    %c0_87 = arith.constant 0 : index
    %c0_88 = arith.constant 0 : index
    %189 = vector.load %arg8[%c1_86, %c0_87, %c0_88] : memref<2x1x128xf32, #tpu.memory_space<vmem>>, vector<1x1x128xf32>
    %190 = vector.shape_cast %189 : vector<1x1x128xf32> to vector<1x128xf32>
    %191 = vector.broadcast %190 : vector<1x128xf32> to vector<8x128xf32>
    %192 = arith.addf %188, %191 : vector<8x128xf32>
    %193 = math.tanh %192 : vector<8x128xf32>
    %194 = arith.addf %193, %184 : vector<8x128xf32>
    %c1_89 = arith.constant 1 : index
    %c0_90 = arith.constant 0 : index
    %c0_91 = arith.constant 0 : index
    %195 = vector.load %arg9[%c1_89, %c0_90, %c0_91] : memref<2x1x128xf32, #tpu.memory_space<vmem>>, vector<1x1x128xf32>
    %196 = vector.shape_cast %195 : vector<1x1x128xf32> to vector<1x128xf32>
    %c1_92 = arith.constant 1 : index
    %c0_93 = arith.constant 0 : index
    %c0_94 = arith.constant 0 : index
    %197 = vector.load %arg10[%c1_92, %c0_93, %c0_94] : memref<2x1x128xf32, #tpu.memory_space<vmem>>, vector<1x1x128xf32>
    %198 = vector.shape_cast %197 : vector<1x1x128xf32> to vector<1x128xf32>
    %cst_95 = arith.constant dense<0.000000e+00> : vector<8xf32>
    %199 = vector.multi_reduction <add>, %194, %cst_95 [1] : vector<8x128xf32> to vector<8xf32>
    %200 = vector.shape_cast %199 : vector<8xf32> to vector<8x1xf32>
    %cst_96 = arith.constant 1.280000e+02 : f32
    %201 = vector.broadcast %cst_96 : f32 to vector<8x1xf32>
    %202 = arith.divf %200, %201 : vector<8x1xf32>
    %203 = arith.mulf %194, %194 : vector<8x128xf32>
    %cst_97 = arith.constant dense<0.000000e+00> : vector<8xf32>
    %204 = vector.multi_reduction <add>, %203, %cst_97 [1] : vector<8x128xf32> to vector<8xf32>
    %205 = vector.shape_cast %204 : vector<8xf32> to vector<8x1xf32>
    %cst_98 = arith.constant 1.280000e+02 : f32
    %206 = vector.broadcast %cst_98 : f32 to vector<8x1xf32>
    %207 = arith.divf %205, %206 : vector<8x1xf32>
    %208 = arith.mulf %202, %202 : vector<8x1xf32>
    %209 = arith.subf %207, %208 : vector<8x1xf32>
    %cst_99 = arith.constant 0.000000e+00 : f32
    %210 = vector.broadcast %cst_99 : f32 to vector<8x1xf32>
    %211 = arith.maximumf %209, %210 : vector<8x1xf32>
    %212 = vector.broadcast %202 : vector<8x1xf32> to vector<8x128xf32>
    %213 = arith.subf %194, %212 : vector<8x128xf32>
    %cst_100 = arith.constant 9.99999974E-6 : f32
    %214 = vector.broadcast %cst_100 : f32 to vector<8x1xf32>
    %215 = arith.addf %211, %214 : vector<8x1xf32>
    %216 = math.rsqrt %215 : vector<8x1xf32>
    %217 = vector.broadcast %216 : vector<8x1xf32> to vector<8x128xf32>
    %218 = arith.mulf %213, %217 : vector<8x128xf32>
    %219 = vector.broadcast %196 : vector<1x128xf32> to vector<8x128xf32>
    %220 = arith.mulf %218, %219 : vector<8x128xf32>
    %221 = vector.broadcast %198 : vector<1x128xf32> to vector<8x128xf32>
    %222 = arith.addf %220, %221 : vector<8x128xf32>
    %cst_101 = arith.constant 0.000000e+00 : f32
    %223 = vector.broadcast %cst_101 : f32 to vector<8x128xf32>
    %224 = arith.maximumf %222, %223 : vector<8x128xf32>
    %225 = arith.truncf %224 : vector<8x128xf32> to vector<8x128xbf16>
    %c0_102 = arith.constant 0 : index
    %c0_103 = arith.constant 0 : index
    %226 = vector.load %arg11[%c0_102, %c0_103] : memref<128x512xbf16, #tpu.memory_space<vmem>>, vector<128x512xbf16>
    %cst_104 = arith.constant dense<0.000000e+00> : vector<8x512xf32>
    %227 = tpu.matmul %225, %226, %cst_104 {dimension_numbers = #tpu.dot_dimension_numbers<[1], [0], [0], [1], [0, 0, 1, 1], [], []>} : vector<8x128xbf16>, vector<128x512xbf16>, vector<8x512xf32> -> vector<8x512xf32>
    %cst_105 = arith.constant dense<0xFF800000> : vector<8xf32>
    %228 = vector.multi_reduction <maximumf>, %227, %cst_105 [1] : vector<8x512xf32> to vector<8xf32>
    %229 = vector.shape_cast %228 : vector<8xf32> to vector<8x1xf32>
    %230 = vector.broadcast %229 : vector<8x1xf32> to vector<8x512xf32>
    %231 = arith.subf %227, %230 : vector<8x512xf32>
    %232 = math.exp %231 : vector<8x512xf32>
    %cst_106 = arith.constant dense<0.000000e+00> : vector<8xf32>
    %233 = vector.multi_reduction <add>, %232, %cst_106 [1] : vector<8x512xf32> to vector<8xf32>
    %234 = vector.shape_cast %233 : vector<8xf32> to vector<8x1xf32>
    %235 = math.log %234 : vector<8x1xf32>
    %236 = vector.broadcast %235 : vector<8x1xf32> to vector<8x512xf32>
    %237 = arith.subf %231, %236 : vector<8x512xf32>
    %c0_107 = arith.constant 0 : index
    %c0_108 = arith.constant 0 : index
    %238 = vector.load %arg12[%c0_107, %c0_108] : memref<8x512xf32, #tpu.memory_space<vmem>>, vector<8x512xf32>
    tpu.vector_store %arg12[%c0_107, %c0_108], %237 {strides = array<i32>} : memref<8x512xf32, #tpu.memory_space<vmem>>, vector<8x512xf32>,
    return
  }
  func.func @transform_0(%arg0: i32) -> (i32, i32) {
    %c0_i32 = arith.constant 0 : i32
    %c0_i32_0 = arith.constant 0 : i32
    return %arg0, %c0_i32 : i32, i32
  }
  func.func @transform_1(%arg0: i32) -> (i32, i32) {
    %c0_i32 = arith.constant 0 : i32
    %c0_i32_0 = arith.constant 0 : i32
    %c0_i32_1 = arith.constant 0 : i32
    return %c0_i32, %c0_i32_0 : i32, i32
  }
  func.func @transform_2(%arg0: i32) -> (i32, i32, i32) {
    %c0_i32 = arith.constant 0 : i32
    %c0_i32_0 = arith.constant 0 : i32
    %c0_i32_1 = arith.constant 0 : i32
    %c0_i32_2 = arith.constant 0 : i32
    return %c0_i32, %c0_i32_0, %c0_i32_1 : i32, i32, i32
  }
  func.func @transform_3(%arg0: i32) -> (i32, i32) {
    %c0_i32 = arith.constant 0 : i32
    %c0_i32_0 = arith.constant 0 : i32
    %c0_i32_1 = arith.constant 0 : i32
    return %c0_i32, %c0_i32_0 : i32, i32
  }
  func.func @transform_4(%arg0: i32) -> (i32, i32) {
    %c0_i32 = arith.constant 0 : i32
    %c0_i32_0 = arith.constant 0 : i32
    %c0_i32_1 = arith.constant 0 : i32
    return %c0_i32, %c0_i32_0 : i32, i32
  }
  func.func @transform_5(%arg0: i32) -> (i32, i32) {
    %c0_i32 = arith.constant 0 : i32
    %c0_i32_0 = arith.constant 0 : i32
    %c0_i32_1 = arith.constant 0 : i32
    return %c0_i32, %c0_i32_0 : i32, i32
  }
  func.func @transform_6(%arg0: i32) -> (i32, i32, i32) {
    %c0_i32 = arith.constant 0 : i32
    %c0_i32_0 = arith.constant 0 : i32
    %c0_i32_1 = arith.constant 0 : i32
    %c0_i32_2 = arith.constant 0 : i32
    return %c0_i32, %c0_i32_0, %c0_i32_1 : i32, i32, i32
  }
  func.func @transform_7(%arg0: i32) -> (i32, i32, i32) {
    %c0_i32 = arith.constant 0 : i32
    %c0_i32_0 = arith.constant 0 : i32
    %c0_i32_1 = arith.constant 0 : i32
    %c0_i32_2 = arith.constant 0 : i32
    return %c0_i32, %c0_i32_0, %c0_i32_1 : i32, i32, i32
  }
  func.func @transform_8(%arg0: i32) -> (i32, i32, i32) {
    %c0_i32 = arith.constant 0 : i32
    %c0_i32_0 = arith.constant 0 : i32
    %c0_i32_1 = arith.constant 0 : i32
    %c0_i32_2 = arith.constant 0 : i32
    return %c0_i32, %c0_i32_0, %c0_i32_1 : i32, i32, i32
  }
  func.func @transform_9(%arg0: i32) -> (i32, i32, i32) {
    %c0_i32 = arith.constant 0 : i32
    %c0_i32_0 = arith.constant 0 : i32
    %c0_i32_1 = arith.constant 0 : i32
    %c0_i32_2 = arith.constant 0 : i32
    return %c0_i32, %c0_i32_0, %c0_i32_1 : i32, i32, i32
  }
  func.func @transform_10(%arg0: i32) -> (i32, i32) {
    %c0_i32 = arith.constant 0 : i32
    %c0_i32_0 = arith.constant 0 : i32
    %c0_i32_1 = arith.constant 0 : i32
    return %c0_i32, %c0_i32_0 : i32, i32
  }
  func.func @transform_11(%arg0: i32) -> (i32, i32) {
    %c0_i32 = arith.constant 0 : i32
    %c0_i32_0 = arith.constant 0 : i32
    return %arg0, %c0_i32 : i32, i32
  }
}

</mosaic_0001>

<llo_original>
// kernel: nplm_forward.1
$region0: #{nplm_forward.1}
  #allocation0 [shape = 'u32[]', space=smem, size = 0x4, offset = 0x4, fixed_abs, tag = 'smem constant byte address 0x4 - core index']
  #allocation1 [shape = 'u32[72,128]{1,0:T(1,128)}', space=vmem, size = 0x9000, scoped, tag = 'internal scratch']
  %s0 = inlined_call_operand.hbm [shape: s32[8,8], index: 0, kind: input, shape index: {}]
  %s1 = inlined_call_operand.vmem [shape: bf16[512,32], index: 1, kind: input, shape index: {}]
  %s2 = inlined_call_operand.vmem [shape: bf16[8,32,128], index: 2, kind: input, shape index: {}]
  %s3 = inlined_call_operand.hbm [shape: f32[1,128], index: 3, kind: input, shape index: {}]
  %s4 = inlined_call_operand.vmem [shape: f32[1,128], index: 4, kind: input, shape index: {}]
  %s5 = inlined_call_operand.hbm [shape: f32[1,128], index: 5, kind: input, shape index: {}]
  %s6 = inlined_call_operand.vmem [shape: bf16[2,128,128], index: 6, kind: input, shape index: {}]
  %s7 = inlined_call_operand.hbm [shape: f32[2,1,128], index: 7, kind: input, shape index: {}]
  %s8 = inlined_call_operand.vmem [shape: f32[2,1,128], index: 8, kind: input, shape index: {}]
  %s9 = inlined_call_operand.hbm [shape: f32[2,1,128], index: 9, kind: input, shape index: {}]
  %s10 = inlined_call_operand.vmem [shape: bf16[128,512], index: 10, kind: input, shape index: {}]
  %s11 = inlined_call_operand.hbm [shape: f32[8,512], index: 11, kind: output, shape index: {}]
  %s12 = sld [smem:[#allocation0]]
  $region74: #{nplm_forward.1} parent=0
    _
  %s14 = ssub.s32 1, %s12
  %s15 = scalar_select 0, %s14, %s12
  $region1: #{nplm_forward.1} parent=0
    #allocation2 [shape = 'u8[4096]{0}', space=vmem, size = 0x1000, scoped, tag = 'input window, operand 0, single buffered']
    #allocation3 [shape = 's32[1]{0}', space=sflag, size = 0x4, scoped, tag = 'scoped memory for nplm_forward.1']
    #allocation4 [shape = 's32[1]{0}', space=sflag, size = 0x4, scoped, tag = 'scoped memory for nplm_forward.1']
    #allocation5 [shape = 'u8[512]{0}', space=vmem, size = 0x400, scoped, tag = 'input window, operand 3, single buffered']
    #allocation6 [shape = 's32[1]{0}', space=sflag, size = 0x4, scoped, tag = 'scoped memory for nplm_forward.1']
    #allocation7 [shape = 'u8[512]{0}', space=vmem, size = 0x400, scoped, tag = 'input window, operand 5, single buffered']
    #allocation8 [shape = 'u8[1024]{0}', space=vmem, size = 0x400, scoped, tag = 'input window, operand 7, single buffered']
    #allocation9 [shape = 's32[1]{0}', space=sflag, size = 0x4, scoped, tag = 'scoped memory for nplm_forward.1']
    #allocation10 [shape = 'u8[1024]{0}', space=vmem, size = 0x400, scoped, tag = 'input window, operand 9, single buffered']
    #allocation11 [shape = 'u8[16384]{0}', space=vmem, size = 0x4000, scoped, tag = 'output window, operand 0, single buffered']
    %16 = vsyncpa [#allocation3], 0
    %17 = vsyncpa [#allocation6], 0
    %18 = vsyncpa [#allocation9], 0
    %19 = vsyncpa [#allocation4], 0
    // Predicated region
    $region2: #{nplm_forward.1} parent=1 // pred_check
      _
    $region3: #{nplm_forward.1} parent=1 // pred_check_branch
      %21 = sbr.rel (0) target = $region5
    $region4: #{nplm_forward.1} parent=1 // pred_region
      %23 = vsyncadd [#allocation3], 0
      %s25 = sshll.u32 %s0, 4
      %s26 = int_to_ptr.hbm [resolvable:$true] %s25
      %s27 = sshll.u32 [#allocation2], 4
      %s28 = int_to_ptr.vmem [resolvable:$true] %s27
      %30 = dma.hbm_to_vmem [thread:$0]  %s26, 128, %s28, [#allocation3]
    $region5: #{nplm_forward.1} parent=1 // pred_fallthru
      _
    // Predicated region
    $region6: #{nplm_forward.1} parent=1 // pred_check
      _
    $region7: #{nplm_forward.1} parent=1 // pred_check_branch
      %32 = sbr.rel (0) target = $region9
    $region8: #{nplm_forward.1} parent=1 // pred_region
      _
    $region9: #{nplm_forward.1} parent=1 // pred_fallthru
      _
    // Predicated region
    $region10: #{nplm_forward.1} parent=1 // pred_check
      _
    $region11: #{nplm_forward.1} parent=1 // pred_check_branch
      %34 = sbr.rel (0) target = $region13
    $region12: #{nplm_forward.1} parent=1 // pred_region
      _
    $region13: #{nplm_forward.1} parent=1 // pred_fallthru
      _
    // Predicated region
    $region14: #{nplm_forward.1} parent=1 // pred_check
      _
    $region15: #{nplm_forward.1} parent=1 // pred_check_branch
      %36 = sbr.rel (0) target = $region17
    $region16: #{nplm_forward.1} parent=1 // pred_region
      %38 = vsyncadd [#allocation6], 0
      %s40 = sshll.u32 %s3, 4
      %s41 = int_to_ptr.hbm [resolvable:$true] %s40
      %s42 = sshll.u32 [#allocation5], 4
      %s43 = int_to_ptr.vmem [resolvable:$true] %s42
      %45 = dma.hbm_to_vmem [thread:$0]  %s41, 16, %s43, [#allocation6]
    $region17: #{nplm_forward.1} parent=1 // pred_fallthru
      _
    // Predicated region
    $region18: #{nplm_forward.1} parent=1 // pred_check
      _
    $region19: #{nplm_forward.1} parent=1 // pred_check_branch
      %47 = sbr.rel (0) target = $region21
    $region20: #{nplm_forward.1} parent=1 // pred_region
      _
    $region21: #{nplm_forward.1} parent=1 // pred_fallthru
      _
    // Predicated region
    $region22: #{nplm_forward.1} parent=1 // pred_check
      _
    $region23: #{nplm_forward.1} parent=1 // pred_check_branch
      %49 = sbr.rel (0) target = $region25
    $region24: #{nplm_forward.1} parent=1 // pred_region
      %51 = vsyncadd [#allocation6], 0
      %s53 = sshll.u32 %s5, 4
      %s54 = int_to_ptr.hbm [resolvable:$true] %s53
      %s55 = sshll.u32 [#allocation7], 4
      %s56 = int_to_ptr.vmem [resolvable:$true] %s55
      %58 = dma.hbm_to_vmem [thread:$0]  %s54, 16, %s56, [#allocation6]
    $region25: #{nplm_forward.1} parent=1 // pred_fallthru
      _
    // Predicated region
    $region26: #{nplm_forward.1} parent=1 // pred_check
      _
    $region27: #{nplm_forward.1} parent=1 // pred_check_branch
      %60 = sbr.rel (0) target = $region29
    $region28: #{nplm_forward.1} parent=1 // pred_region
      _
    $region29: #{nplm_forward.1} parent=1 // pred_fallthru
      _
    // Predicated region
    $region30: #{nplm_forward.1} parent=1 // pred_check
      _
    $region31: #{nplm_forward.1} parent=1 // pred_check_branch
      %62 = sbr.rel (0) target = $region33
    $region32: #{nplm_forward.1} parent=1 // pred_region
      %64 = vsyncadd [#allocation9], 0
      %s65 = sshll.u32 %s7, 4
      %s66 = int_to_ptr.hbm [resolvable:$true] %s65
      %s67 = sshll.u32 [#allocation8], 4
      %s68 = int_to_ptr.vmem [resolvable:$true] %s67
      %73 = dma.hbm_to_vmem [thread:$0]  %s66, 32, %s68, [#allocation9], 16, 16, 1
    $region33: #{nplm_forward.1} parent=1 // pred_fallthru
      _
    // Predicated region
    $region34: #{nplm_forward.1} parent=1 // pred_check
      _
    $region35: #{nplm_forward.1} parent=1 // pred_check_branch
      %75 = sbr.rel (0) target = $region37
    $region36: #{nplm_forward.1} parent=1 // pred_region
      _
    $region37: #{nplm_forward.1} parent=1 // pred_fallthru
      _
    // Predicated region
    $region38: #{nplm_forward.1} parent=1 // pred_check
      _
    $region39: #{nplm_forward.1} parent=1 // pred_check_branch
      %77 = sbr.rel (0) target = $region41
    $region40: #{nplm_forward.1} parent=1 // pred_region
      %79 = vsyncadd [#allocation9], 0
      %s80 = sshll.u32 %s9, 4
      %s81 = int_to_ptr.hbm [resolvable:$true] %s80
      %s82 = sshll.u32 [#allocation10], 4
      %s83 = int_to_ptr.vmem [resolvable:$true] %s82
      %88 = dma.hbm_to_vmem [thread:$0]  %s81, 32, %s83, [#allocation9], 16, 16, 1
    $region41: #{nplm_forward.1} parent=1 // pred_fallthru
      _
    // Predicated region
    $region42: #{nplm_forward.1} parent=1 // pred_check
      _
    $region43: #{nplm_forward.1} parent=1 // pred_check_branch
      %90 = sbr.rel (0) target = $region45
    $region44: #{nplm_forward.1} parent=1 // pred_region
      _
    $region45: #{nplm_forward.1} parent=1 // pred_fallthru
      _
    // Predicated region
    $region46: #{nplm_forward.1} parent=1 // pred_check
      _
    $region47: #{nplm_forward.1} parent=1 // pred_check_branch
      %92 = sbr.rel (0) target = $region49
    $region48: #{nplm_forward.1} parent=1 // pred_region
      %94 = dma.done [#allocation3], 128
    $region49: #{nplm_forward.1} parent=1 // pred_fallthru
      _
    // Predicated region
    $region50: #{nplm_forward.1} parent=1 // pred_check
      _
    $region51: #{nplm_forward.1} parent=1 // pred_check_branch
      %96 = sbr.rel (0) target = $region53
    $region52: #{nplm_forward.1} parent=1 // pred_region
      %98 = dma.done [#allocation6], 16
    $region53: #{nplm_forward.1} parent=1 // pred_fallthru
      _
    // Predicated region
    $region54: #{nplm_forward.1} parent=1 // pred_check
      _
    $region55: #{nplm_forward.1} parent=1 // pred_check_branch
      %100 = sbr.rel (0) target = $region57
    $region56: #{nplm_forward.1} parent=1 // pred_region
      %102 = dma.done [#allocation6], 16
    $region57: #{nplm_forward.1} parent=1 // pred_fallthru
      _
    // Predicated region
    $region58: #{nplm_forward.1} parent=1 // pred_check
      _
    $region59: #{nplm_forward.1} parent=1 // pred_check_branch
      %104 = sbr.rel (0) target = $region61
    $region60: #{nplm_forward.1} parent=1 // pred_region
      %106 = dma.done [#allocation9], 32
    $region61: #{nplm_forward.1} parent=1 // pred_fallthru
      _
    // Predicated region
    $region62: #{nplm_forward.1} parent=1 // pred_check
      _
    $region63: #{nplm_forward.1} parent=1 // pred_check_branch
      %108 = sbr.rel (0) target = $region65
    $region64: #{nplm_forward.1} parent=1 // pred_region
      %110 = dma.done [#allocation9], 32
    $region65: #{nplm_forward.1} parent=1 // pred_fallthru
      _
    %v112 = vld [vmem:[#allocation2] sm:$0xff]
    %v113 = vlaneseq
    %v114 = vand.u32 %v113, 127
    %v115 = vadd.s32 %v114, 128
    %v116 = vadd.s32 %v114, 256
    %v117 = vadd.s32 %v114, 384
    %118 = vset.pattern.permute.xlu0 0
    %119 = vperm.xlu0 %118, %v112
    %v120 = vpop.permute.xlu0 %119
    %vm121 = vcmp.eq.s32.totalorder %v120, %v114
    %vm122 = vcmp.eq.s32.totalorder %v120, %v115
    %vm123 = vcmp.eq.s32.totalorder %v120, %v116
    %vm124 = vcmp.eq.s32.totalorder %v120, %v117
    %v125 = vsel %vm121, 1, 0
    %v126 = vsel %vm122, 1, 0
    %v127 = vsel %vm123, 1, 0
    %v128 = vsel %vm124, 1, 0
    %v129 = vcvt.s32.f32 %v125
    %v130 = vcvt.s32.f32 %v126
    %v131 = vcvt.s32.f32 %v127
    %v132 = vcvt.s32.f32 %v128
    %v133 = vpack.c.bf16 %v129, %v129
    %v134 = vpack.c.bf16 %v130, %v130
    %v135 = vpack.c.bf16 %v131, %v131
    %v136 = vpack.c.bf16 %v132, %v132
    %v137 = vld [vmem:[%s1] sm:$0xf]
    %v138 = vld [vmem:[%s1 + $0x4] sm:$0xf]
    %v139 = vld [vmem:[%s1 + $0x8] sm:$0xf]
    %v140 = vld [vmem:[%s1 + $0xc] sm:$0xf]
    %v141 = vld [vmem:[%s1 + $0x10] sm:$0xf]
    %v142 = vld [vmem:[%s1 + $0x14] sm:$0xf]
    %v143 = vld [vmem:[%s1 + $0x18] sm:$0xf]
    %v144 = vld [vmem:[%s1 + $0x1c] sm:$0xf]
    %v145 = vld [vmem:[%s1 + $0x20] sm:$0xf]
    %v146 = vld [vmem:[%s1 + $0x24] sm:$0xf]
    %v147 = vld [vmem:[%s1 + $0x28] sm:$0xf]
    %v148 = vld [vmem:[%s1 + $0x2c] sm:$0xf]
    %v149 = vld [vmem:[%s1 + $0x30] sm:$0xf]
    %v150 = vld [vmem:[%s1 + $0x34] sm:$0xf]
    %v151 = vld [vmem:[%s1 + $0x38] sm:$0xf]
    %v152 = vld [vmem:[%s1 + $0x3c] sm:$0xf]
    %v153 = vld [vmem:[%s1 + $0x40] sm:$0xf]
    %v154 = vld [vmem:[%s1 + $0x44] sm:$0xf]
    %v155 = vld [vmem:[%s1 + $0x48] sm:$0xf]
    %v156 = vld [vmem:[%s1 + $0x4c] sm:$0xf]
    %v157 = vld [vmem:[%s1 + $0x50] sm:$0xf]
    %v158 = vld [vmem:[%s1 + $0x54] sm:$0xf]
    %v159 = vld [vmem:[%s1 + $0x58] sm:$0xf]
    %v160 = vld [vmem:[%s1 + $0x5c] sm:$0xf]
    %v161 = vld [vmem:[%s1 + $0x60] sm:$0xf]
    %v162 = vld [vmem:[%s1 + $0x64] sm:$0xf]
    %v163 = vld [vmem:[%s1 + $0x68] sm:$0xf]
    %v164 = vld [vmem:[%s1 + $0x6c] sm:$0xf]
    %v165 = vld [vmem:[%s1 + $0x70] sm:$0xf]
    %v166 = vld [vmem:[%s1 + $0x74] sm:$0xf]
    %v167 = vld [vmem:[%s1 + $0x78] sm:$0xf]
    %v168 = vld [vmem:[%s1 + $0x7c] sm:$0xf]
    %v169 = vld [vmem:[%s1 + $0x80] sm:$0xf]
    %v170 = vld [vmem:[%s1 + $0x84] sm:$0xf]
    %v171 = vld [vmem:[%s1 + $0x88] sm:$0xf]
    %v172 = vld [vmem:[%s1 + $0x8c] sm:$0xf]
    %v173 = vld [vmem:[%s1 + $0x90] sm:$0xf]
    %v174 = vld [vmem:[%s1 + $0x94] sm:$0xf]
    %v175 = vld [vmem:[%s1 + $0x98] sm:$0xf]
    %v176 = vld [vmem:[%s1 + $0x9c] sm:$0xf]
    %v177 = vld [vmem:[%s1 + $0xa0] sm:$0xf]
    %v178 = vld [vmem:[%s1 + $0xa4] sm:$0xf]
    %v179 = vld [vmem:[%s1 + $0xa8] sm:$0xf]
    %v180 = vld [vmem:[%s1 + $0xac] sm:$0xf]
    %v181 = vld [vmem:[%s1 + $0xb0] sm:$0xf]
    %v182 = vld [vmem:[%s1 + $0xb4] sm:$0xf]
    %v183 = vld [vmem:[%s1 + $0xb8] sm:$0xf]
    %v184 = vld [vmem:[%s1 + $0xbc] sm:$0xf]
    %v185 = vld [vmem:[%s1 + $0xc0] sm:$0xf]
    %v186 = vld [vmem:[%s1 + $0xc4] sm:$0xf]
    %v187 = vld [vmem:[%s1 + $0xc8] sm:$0xf]
    %v188 = vld [vmem:[%s1 + $0xcc] sm:$0xf]
    %v189 = vld [vmem:[%s1 + $0xd0] sm:$0xf]
    %v190 = vld [vmem:[%s1 + $0xd4] sm:$0xf]
    %v191 = vld [vmem:[%s1 + $0xd8] sm:$0xf]
    %v192 = vld [vmem:[%s1 + $0xdc] sm:$0xf]
    %v193 = vld [vmem:[%s1 + $0xe0] sm:$0xf]
    %v194 = vld [vmem:[%s1 + $0xe4] sm:$0xf]
    %v195 = vld [vmem:[%s1 + $0xe8] sm:$0xf]
    %v196 = vld [vmem:[%s1 + $0xec] sm:$0xf]
    %v197 = vld [vmem:[%s1 + $0xf0] sm:$0xf]
    %v198 = vld [vmem:[%s1 + $0xf4] sm:$0xf]
    %v199 = vld [vmem:[%s1 + $0xf8] sm:$0xf]
    %v200 = vld [vmem:[%s1 + $0xfc] sm:$0xf]
    %v265 = vunpack.c.l.b16 %v137
    %v266 = vunpack.c.l.b16 %v138
    %v267 = vunpack.c.l.b16 %v139
    %v268 = vunpack.c.l.b16 %v140
    %v269 = vunpack.c.l.b16 %v141
    %v270 = vunpack.c.l.b16 %v142
    %v271 = vunpack.c.l.b16 %v143
    %v272 = vunpack.c.l.b16 %v144
    %v273 = vunpack.c.l.b16 %v145
    %v274 = vunpack.c.l.b16 %v146
    %v275 = vunpack.c.l.b16 %v147
    %v276 = vunpack.c.l.b16 %v148
    %v277 = vunpack.c.l.b16 %v149
    %v278 = vunpack.c.l.b16 %v150
    %v279 = vunpack.c.l.b16 %v151
    %v280 = vunpack.c.l.b16 %v152
    %v281 = vunpack.c.l.b16 %v153
    %v282 = vunpack.c.l.b16 %v154
    %v283 = vunpack.c.l.b16 %v155
    %v284 = vunpack.c.l.b16 %v156
    %v285 = vunpack.c.l.b16 %v157
    %v286 = vunpack.c.l.b16 %v158
    %v287 = vunpack.c.l.b16 %v159
    %v288 = vunpack.c.l.b16 %v160
    %v289 = vunpack.c.l.b16 %v161
    %v290 = vunpack.c.l.b16 %v162
    %v291 = vunpack.c.l.b16 %v163
    %v292 = vunpack.c.l.b16 %v164
    %v293 = vunpack.c.l.b16 %v165
    %v294 = vunpack.c.l.b16 %v166
    %v295 = vunpack.c.l.b16 %v167
    %v296 = vunpack.c.l.b16 %v168
    %v297 = vunpack.c.l.b16 %v169
    %v298 = vunpack.c.l.b16 %v170
    %v299 = vunpack.c.l.b16 %v171
    %v300 = vunpack.c.l.b16 %v172
    %v301 = vunpack.c.l.b16 %v173
    %v302 = vunpack.c.l.b16 %v174
    %v303 = vunpack.c.l.b16 %v175
    %v304 = vunpack.c.l.b16 %v176
    %v305 = vunpack.c.l.b16 %v177
    %v306 = vunpack.c.l.b16 %v178
    %v307 = vunpack.c.l.b16 %v179
    %v308 = vunpack.c.l.b16 %v180
    %v309 = vunpack.c.l.b16 %v181
    %v310 = vunpack.c.l.b16 %v182
    %v311 = vunpack.c.l.b16 %v183
    %v312 = vunpack.c.l.b16 %v184
    %v313 = vunpack.c.l.b16 %v185
    %v314 = vunpack.c.l.b16 %v186
    %v315 = vunpack.c.l.b16 %v187
    %v316 = vunpack.c.l.b16 %v188
    %v317 = vunpack.c.l.b16 %v189
    %v318 = vunpack.c.l.b16 %v190
    %v319 = vunpack.c.l.b16 %v191
    %v320 = vunpack.c.l.b16 %v192
    %v321 = vunpack.c.l.b16 %v193
    %v322 = vunpack.c.l.b16 %v194
    %v323 = vunpack.c.l.b16 %v195
    %v324 = vunpack.c.l.b16 %v196
    %v325 = vunpack.c.l.b16 %v197
    %v326 = vunpack.c.l.b16 %v198
    %v327 = vunpack.c.l.b16 %v199
    %v328 = vunpack.c.l.b16 %v200
    %v329 = vpack.c.b16 %v266, %v265
    %v330 = vpack.c.b16 %v268, %v267
    %v331 = vpack.c.b16 %v270, %v269
    %v332 = vpack.c.b16 %v272, %v271
    %v333 = vpack.c.b16 %v274, %v273
    %v334 = vpack.c.b16 %v276, %v275
    %v335 = vpack.c.b16 %v278, %v277
    %v336 = vpack.c.b16 %v280, %v279
    %v337 = vpack.c.b16 %v282, %v281
    %v338 = vpack.c.b16 %v284, %v283
    %v339 = vpack.c.b16 %v286, %v285
    %v340 = vpack.c.b16 %v288, %v287
    %v341 = vpack.c.b16 %v290, %v289
    %v342 = vpack.c.b16 %v292, %v291
    %v343 = vpack.c.b16 %v294, %v293
    %v344 = vpack.c.b16 %v296, %v295
    %v345 = vpack.c.b16 %v298, %v297
    %v346 = vpack.c.b16 %v300, %v299
    %v347 = vpack.c.b16 %v302, %v301
    %v348 = vpack.c.b16 %v304, %v303
    %v349 = vpack.c.b16 %v306, %v305
    %v350 = vpack.c.b16 %v308, %v307
    %v351 = vpack.c.b16 %v310, %v309
    %v352 = vpack.c.b16 %v312, %v311
    %v353 = vpack.c.b16 %v314, %v313
    %v354 = vpack.c.b16 %v316, %v315
    %v355 = vpack.c.b16 %v318, %v317
    %v356 = vpack.c.b16 %v320, %v319
    %v357 = vpack.c.b16 %v322, %v321
    %v358 = vpack.c.b16 %v324, %v323
    %v359 = vpack.c.b16 %v326, %v325
    %v360 = vpack.c.b16 %v328, %v327
    %393 = vmatpush.bf16.msra.mxu0 %v336
    %394 = vmatpush.bf16.msra.mxu0 %v335
    %395 = vmatpush.bf16.msra.mxu0 %v334
    %396 = vmatpush.bf16.msra.mxu0 %v333
    %397 = vmatpush.bf16.msra.mxu0 %v332
    %398 = vmatpush.bf16.msra.mxu0 %v331
    %399 = vmatpush.bf16.msra.mxu0 %v330
    %400 = vmatpush.bf16.msra.mxu0 %v329
    %401 = vmatmul.bf16.gmra.mxu0 %v133
    %v402 = vpop.f32.mrf.mxu0
    %v403 = vadd.f32 0.0, %v402
    %v404 = vpop.f32.mrf.mxu0
    %405 = vdwg.mxu0
    %406 = vmatpush.bf16.msra.mxu0 %v344
    %407 = vmatpush.bf16.msra.mxu0 %v343
    %408 = vmatpush.bf16.msra.mxu0 %v342
    %409 = vmatpush.bf16.msra.mxu0 %v341
    %410 = vmatpush.bf16.msra.mxu0 %v340
    %411 = vmatpush.bf16.msra.mxu0 %v339
    %412 = vmatpush.bf16.msra.mxu0 %v338
    %413 = vmatpush.bf16.msra.mxu0 %v337
    %414 = vmatmul.bf16.gmra.mxu0 %v134
    %v415 = vpop.f32.mrf.mxu0
    %v416 = vadd.f32 %v403, %v415
    %v417 = vpop.f32.mrf.mxu0
    %418 = vdwg.mxu0
    %419 = vmatpush.bf16.msra.mxu0 %v352
    %420 = vmatpush.bf16.msra.mxu0 %v351
    %421 = vmatpush.bf16.msra.mxu0 %v350
    %422 = vmatpush.bf16.msra.mxu0 %v349
    %423 = vmatpush.bf16.msra.mxu0 %v348
    %424 = vmatpush.bf16.msra.mxu0 %v347
    %425 = vmatpush.bf16.msra.mxu0 %v346
    %426 = vmatpush.bf16.msra.mxu0 %v345
    %427 = vmatmul.bf16.gmra.mxu0 %v135
    %v428 = vpop.f32.mrf.mxu0
    %v429 = vadd.f32 %v416, %v428
    %v430 = vpop.f32.mrf.mxu0
    %431 = vdwg.mxu0
    %432 = vmatpush.bf16.msra.mxu0 %v360
    %433 = vmatpush.bf16.msra.mxu0 %v359
    %434 = vmatpush.bf16.msra.mxu0 %v358
    %435 = vmatpush.bf16.msra.mxu0 %v357
    %436 = vmatpush.bf16.msra.mxu0 %v356
    %437 = vmatpush.bf16.msra.mxu0 %v355
    %438 = vmatpush.bf16.msra.mxu0 %v354
    %439 = vmatpush.bf16.msra.mxu0 %v353
    %440 = vmatmul.bf16.gmra.mxu0 %v136
    %v441 = vpop.f32.mrf.mxu0
    %v442 = vadd.f32 %v429, %v441
    %v443 = vpop.f32.mrf.mxu0
    %444 = vdwg.mxu0
    %v445 = vpack.c.bf16 %v442, %v442
    %v446 = vld [vmem:[%s2] sm:$0xf]
    %v447 = vld [vmem:[%s2 + $0x4] sm:$0xf]
    %v448 = vld [vmem:[%s2 + $0x8] sm:$0xf]
    %v449 = vld [vmem:[%s2 + $0xc] sm:$0xf]
    %450 = vset.pattern.permute.xlu0 1
    %451 = vperm.xlu0 %450, %v112
    %v452 = vpop.permute.xlu0 %451
    %vm453 = vcmp.eq.s32.totalorder %v452, %v114
    %vm454 = vcmp.eq.s32.totalorder %v452, %v115
    %vm455 = vcmp.eq.s32.totalorder %v452, %v116
    %vm456 = vcmp.eq.s32.totalorder %v452, %v117
    %v457 = vsel %vm453, 1, 0
    %v458 = vsel %vm454, 1, 0
    %v459 = vsel %vm455, 1, 0
    %v460 = vsel %vm456, 1, 0
    %v461 = vcvt.s32.f32 %v457
    %v462 = vcvt.s32.f32 %v458
    %v463 = vcvt.s32.f32 %v459
    %v464 = vcvt.s32.f32 %v460
    %v465 = vpack.c.bf16 %v461, %v461
    %v466 = vpack.c.bf16 %v462, %v462
    %v467 = vpack.c.bf16 %v463, %v463
    %v468 = vpack.c.bf16 %v464, %v464
    %469 = vmatpush.bf16.msra.mxu0 %v336
    %470 = vmatpush.bf16.msra.mxu0 %v335
    %471 = vmatpush.bf16.msra.mxu0 %v334
    %472 = vmatpush.bf16.msra.mxu0 %v333
    %473 = vmatpush.bf16.msra.mxu0 %v332
    %474 = vmatpush.bf16.msra.mxu0 %v331
    %475 = vmatpush.bf16.msra.mxu0 %v330
    %476 = vmatpush.bf16.msra.mxu0 %v329
    %477 = vmatmul.bf16.gmra.mxu0 %v465
    %v478 = vpop.f32.mrf.mxu0
    %v479 = vadd.f32 0.0, %v478
    %v480 = vpop.f32.mrf.mxu0
    %481 = vdwg.mxu0
    %482 = vmatpush.bf16.msra.mxu0 %v344
    %483 = vmatpush.bf16.msra.mxu0 %v343
    %484 = vmatpush.bf16.msra.mxu0 %v342
    %485 = vmatpush.bf16.msra.mxu0 %v341
    %486 = vmatpush.bf16.msra.mxu0 %v340
    %487 = vmatpush.bf16.msra.mxu0 %v339
    %488 = vmatpush.bf16.msra.mxu0 %v338
    %489 = vmatpush.bf16.msra.mxu0 %v337
    %490 = vmatmul.bf16.gmra.mxu0 %v466
    %v491 = vpop.f32.mrf.mxu0
    %v492 = vadd.f32 %v479, %v491
    %v493 = vpop.f32.mrf.mxu0
    %494 = vdwg.mxu0
    %495 = vmatpush.bf16.msra.mxu0 %v352
    %496 = vmatpush.bf16.msra.mxu0 %v351
    %497 = vmatpush.bf16.msra.mxu0 %v350
    %498 = vmatpush.bf16.msra.mxu0 %v349
    %499 = vmatpush.bf16.msra.mxu0 %v348
    %500 = vmatpush.bf16.msra.mxu0 %v347
    %501 = vmatpush.bf16.msra.mxu0 %v346
    %502 = vmatpush.bf16.msra.mxu0 %v345
    %503 = vmatmul.bf16.gmra.mxu0 %v467
    %v504 = vpop.f32.mrf.mxu0
    %v505 = vadd.f32 %v492, %v504
    %v506 = vpop.f32.mrf.mxu0
    %507 = vdwg.mxu0
    %508 = vmatpush.bf16.msra.mxu0 %v360
    %509 = vmatpush.bf16.msra.mxu0 %v359
    %510 = vmatpush.bf16.msra.mxu0 %v358
    %511 = vmatpush.bf16.msra.mxu0 %v357
    %512 = vmatpush.bf16.msra.mxu0 %v356
    %513 = vmatpush.bf16.msra.mxu0 %v355
    %514 = vmatpush.bf16.msra.mxu0 %v354
    %515 = vmatpush.bf16.msra.mxu0 %v353
    %516 = vmatmul.bf16.gmra.mxu0 %v468
    %v517 = vpop.f32.mrf.mxu0
    %v518 = vadd.f32 %v505, %v517
    %v519 = vpop.f32.mrf.mxu0
    %520 = vdwg.mxu0
    %v521 = vpack.c.bf16 %v518, %v518
    %s522 = scalar_lea.vmem %s2, 16
    %v523 = vld [vmem:[%s522] sm:$0xf]
    %v524 = vld [vmem:[%s522 + $0x4] sm:$0xf]
    %v525 = vld [vmem:[%s522 + $0x8] sm:$0xf]
    %v526 = vld [vmem:[%s522 + $0xc] sm:$0xf]
    %v531 = vunpack.c.l.b16 %v523
    %v532 = vunpack.c.l.b16 %v524
    %v533 = vunpack.c.l.b16 %v525
    %v534 = vunpack.c.l.b16 %v526
    %v535 = vpack.c.b16 %v532, %v531
    %v536 = vpack.c.b16 %v534, %v533
    %vm539 = vcmask 261120
    %v541 = vsel %vm539, %v521, 0
    %543 = vmatpush.bf16.msra.mxu0 0
    %544 = vmatpush.bf16.msra.mxu0 0
    %545 = vmatpush.bf16.msra.mxu0 0
    %546 = vmatpush.bf16.msra.mxu0 0
    %547 = vmatpush.bf16.msra.mxu0 0
    %548 = vmatpush.bf16.msra.mxu0 0
    %549 = vmatpush.bf16.msra.mxu0 %v536
    %550 = vmatpush.bf16.msra.mxu0 %v535
    %551 = vmatmul.bf16.gmra.mxu0 %v541
    %v552 = vpop.f32.mrf.mxu0
    %v553 = vadd.f32 0.0, %v552
    %v554 = vpop.f32.mrf.mxu0
    %555 = vdwg.mxu0
    %v560 = vunpack.c.l.b16 %v446
    %v561 = vunpack.c.l.b16 %v447
    %v562 = vunpack.c.l.b16 %v448
    %v563 = vunpack.c.l.b16 %v449
    %v564 = vpack.c.b16 %v561, %v560
    %v565 = vpack.c.b16 %v563, %v562
    %v569 = vsel %vm539, %v445, 0
    %571 = vmatpush.bf16.msra.mxu0 0
    %572 = vmatpush.bf16.msra.mxu0 0
    %573 = vmatpush.bf16.msra.mxu0 0
    %574 = vmatpush.bf16.msra.mxu0 0
    %575 = vmatpush.bf16.msra.mxu0 0
    %576 = vmatpush.bf16.msra.mxu0 0
    %577 = vmatpush.bf16.msra.mxu0 %v565
    %578 = vmatpush.bf16.msra.mxu0 %v564
    %579 = vmatmul.bf16.gmra.mxu0 %v569
    %v580 = vpop.f32.mrf.mxu0
    %v581 = vadd.f32 %v553, %v580
    %v582 = vpop.f32.mrf.mxu0
    %583 = vdwg.mxu0
    %584 = vset.pattern.permute.xlu0 2
    %585 = vperm.xlu0 %584, %v112
    %v586 = vpop.permute.xlu0 %585
    %vm587 = vcmp.eq.s32.totalorder %v586, %v114
    %vm588 = vcmp.eq.s32.totalorder %v586, %v115
    %vm589 = vcmp.eq.s32.totalorder %v586, %v116
    %vm590 = vcmp.eq.s32.totalorder %v586, %v117
    %v591 = vsel %vm587, 1, 0
    %v592 = vsel %vm588, 1, 0
    %v593 = vsel %vm589, 1, 0
    %v594 = vsel %vm590, 1, 0
    %v595 = vcvt.s32.f32 %v591
    %v596 = vcvt.s32.f32 %v592
    %v597 = vcvt.s32.f32 %v593
    %v598 = vcvt.s32.f32 %v594
    %v599 = vpack.c.bf16 %v595, %v595
    %v600 = vpack.c.bf16 %v596, %v596
    %v601 = vpack.c.bf16 %v597, %v597
    %v602 = vpack.c.bf16 %v598, %v598
    %603 = vmatpush.bf16.msra.mxu0 %v336
    %604 = vmatpush.bf16.msra.mxu0 %v335
    %605 = vmatpush.bf16.msra.mxu0 %v334
    %606 = vmatpush.bf16.msra.mxu0 %v333
    %607 = vmatpush.bf16.msra.mxu0 %v332
    %608 = vmatpush.bf16.msra.mxu0 %v331
    %609 = vmatpush.bf16.msra.mxu0 %v330
    %610 = vmatpush.bf16.msra.mxu0 %v329
    %611 = vmatmul.bf16.gmra.mxu0 %v599
    %v612 = vpop.f32.mrf.mxu0
    %v613 = vadd.f32 0.0, %v612
    %v614 = vpop.f32.mrf.mxu0
    %615 = vdwg.mxu0
    %616 = vmatpush.bf16.msra.mxu0 %v344
    %617 = vmatpush.bf16.msra.mxu0 %v343
    %618 = vmatpush.bf16.msra.mxu0 %v342
    %619 = vmatpush.bf16.msra.mxu0 %v341
    %620 = vmatpush.bf16.msra.mxu0 %v340
    %621 = vmatpush.bf16.msra.mxu0 %v339
    %622 = vmatpush.bf16.msra.mxu0 %v338
    %623 = vmatpush.bf16.msra.mxu0 %v337
    %624 = vmatmul.bf16.gmra.mxu0 %v600
    %v625 = vpop.f32.mrf.mxu0
    %v626 = vadd.f32 %v613, %v625
    %v627 = vpop.f32.mrf.mxu0
    %628 = vdwg.mxu0
    %629 = vmatpush.bf16.msra.mxu0 %v352
    %630 = vmatpush.bf16.msra.mxu0 %v351
    %631 = vmatpush.bf16.msra.mxu0 %v350
    %632 = vmatpush.bf16.msra.mxu0 %v349
    %633 = vmatpush.bf16.msra.mxu0 %v348
    %634 = vmatpush.bf16.msra.mxu0 %v347
    %635 = vmatpush.bf16.msra.mxu0 %v346
    %636 = vmatpush.bf16.msra.mxu0 %v345
    %637 = vmatmul.bf16.gmra.mxu0 %v601
    %v638 = vpop.f32.mrf.mxu0
    %v639 = vadd.f32 %v626, %v638
    %v640 = vpop.f32.mrf.mxu0
    %641 = vdwg.mxu0
    %642 = vmatpush.bf16.msra.mxu0 %v360
    %643 = vmatpush.bf16.msra.mxu0 %v359
    %644 = vmatpush.bf16.msra.mxu0 %v358
    %645 = vmatpush.bf16.msra.mxu0 %v357
    %646 = vmatpush.bf16.msra.mxu0 %v356
    %647 = vmatpush.bf16.msra.mxu0 %v355
    %648 = vmatpush.bf16.msra.mxu0 %v354
    %649 = vmatpush.bf16.msra.mxu0 %v353
    %650 = vmatmul.bf16.gmra.mxu0 %v602
    %v651 = vpop.f32.mrf.mxu0
    %v652 = vadd.f32 %v639, %v651
    %v653 = vpop.f32.mrf.mxu0
    %654 = vdwg.mxu0
    %v655 = vpack.c.bf16 %v652, %v652
    %s656 = scalar_lea.vmem %s2, 32
    %v657 = vld [vmem:[%s656] sm:$0xf]
    %v658 = vld [vmem:[%s656 + $0x4] sm:$0xf]
    %v659 = vld [vmem:[%s656 + $0x8] sm:$0xf]
    %v660 = vld [vmem:[%s656 + $0xc] sm:$0xf]
    %v665 = vunpack.c.l.b16 %v657
    %v666 = vunpack.c.l.b16 %v658
    %v667 = vunpack.c.l.b16 %v659
    %v668 = vunpack.c.l.b16 %v660
    %v669 = vpack.c.b16 %v666, %v665
    %v670 = vpack.c.b16 %v668, %v667
    %v674 = vsel %vm539, %v655, 0
    %676 = vmatpush.bf16.msra.mxu0 0
    %677 = vmatpush.bf16.msra.mxu0 0
    %678 = vmatpush.bf16.msra.mxu0 0
    %679 = vmatpush.bf16.msra.mxu0 0
    %680 = vmatpush.bf16.msra.mxu0 0
    %681 = vmatpush.bf16.msra.mxu0 0
    %682 = vmatpush.bf16.msra.mxu0 %v670
    %683 = vmatpush.bf16.msra.mxu0 %v669
    %684 = vmatmul.bf16.gmra.mxu0 %v674
    %v685 = vpop.f32.mrf.mxu0
    %v686 = vadd.f32 0.0, %v685
    %v687 = vpop.f32.mrf.mxu0
    %688 = vdwg.mxu0
    %v689 = vadd.f32 %v581, %v686
    %690 = vset.pattern.permute.xlu0 3
    %691 = vperm.xlu0 %690, %v112
    %v692 = vpop.permute.xlu0 %691
    %vm693 = vcmp.eq.s32.totalorder %v692, %v114
    %vm694 = vcmp.eq.s32.totalorder %v692, %v115
    %vm695 = vcmp.eq.s32.totalorder %v692, %v116
    %vm696 = vcmp.eq.s32.totalorder %v692, %v117
    %v697 = vsel %vm693, 1, 0
    %v698 = vsel %vm694, 1, 0
    %v699 = vsel %vm695, 1, 0
    %v700 = vsel %vm696, 1, 0
    %v701 = vcvt.s32.f32 %v697
    %v702 = vcvt.s32.f32 %v698
    %v703 = vcvt.s32.f32 %v699
    %v704 = vcvt.s32.f32 %v700
    %v705 = vpack.c.bf16 %v701, %v701
    %v706 = vpack.c.bf16 %v702, %v702
    %v707 = vpack.c.bf16 %v703, %v703
    %v708 = vpack.c.bf16 %v704, %v704
    %709 = vmatpush.bf16.msra.mxu0 %v336
    %710 = vmatpush.bf16.msra.mxu0 %v335
    %711 = vmatpush.bf16.msra.mxu0 %v334
    %712 = vmatpush.bf16.msra.mxu0 %v333
    %713 = vmatpush.bf16.msra.mxu0 %v332
    %714 = vmatpush.bf16.msra.mxu0 %v331
    %715 = vmatpush.bf16.msra.mxu0 %v330
    %716 = vmatpush.bf16.msra.mxu0 %v329
    %717 = vmatmul.bf16.gmra.mxu0 %v705
    %v718 = vpop.f32.mrf.mxu0
    %v719 = vadd.f32 0.0, %v718
    %v720 = vpop.f32.mrf.mxu0
    %721 = vdwg.mxu0
    %722 = vmatpush.bf16.msra.mxu0 %v344
    %723 = vmatpush.bf16.msra.mxu0 %v343
    %724 = vmatpush.bf16.msra.mxu0 %v342
    %725 = vmatpush.bf16.msra.mxu0 %v341
    %726 = vmatpush.bf16.msra.mxu0 %v340
    %727 = vmatpush.bf16.msra.mxu0 %v339
    %728 = vmatpush.bf16.msra.mxu0 %v338
    %729 = vmatpush.bf16.msra.mxu0 %v337
    %730 = vmatmul.bf16.gmra.mxu0 %v706
    %v731 = vpop.f32.mrf.mxu0
    %v732 = vadd.f32 %v719, %v731
    %v733 = vpop.f32.mrf.mxu0
    %734 = vdwg.mxu0
    %735 = vmatpush.bf16.msra.mxu0 %v352
    %736 = vmatpush.bf16.msra.mxu0 %v351
    %737 = vmatpush.bf16.msra.mxu0 %v350
    %738 = vmatpush.bf16.msra.mxu0 %v349
    %739 = vmatpush.bf16.msra.mxu0 %v348
    %740 = vmatpush.bf16.msra.mxu0 %v347
    %741 = vmatpush.bf16.msra.mxu0 %v346
    %742 = vmatpush.bf16.msra.mxu0 %v345
    %743 = vmatmul.bf16.gmra.mxu0 %v707
    %v744 = vpop.f32.mrf.mxu0
    %v745 = vadd.f32 %v732, %v744
    %v746 = vpop.f32.mrf.mxu0
    %747 = vdwg.mxu0
    %748 = vmatpush.bf16.msra.mxu0 %v360
    %749 = vmatpush.bf16.msra.mxu0 %v359
    %750 = vmatpush.bf16.msra.mxu0 %v358
    %751 = vmatpush.bf16.msra.mxu0 %v357
    %752 = vmatpush.bf16.msra.mxu0 %v356
    %753 = vmatpush.bf16.msra.mxu0 %v355
    %754 = vmatpush.bf16.msra.mxu0 %v354
    %755 = vmatpush.bf16.msra.mxu0 %v353
    %756 = vmatmul.bf16.gmra.mxu0 %v708
    %v757 = vpop.f32.mrf.mxu0
    %v758 = vadd.f32 %v745, %v757
    %v759 = vpop.f32.mrf.mxu0
    %760 = vdwg.mxu0
    %v761 = vpack.c.bf16 %v758, %v758
    %s762 = scalar_lea.vmem %s2, 48
    %v763 = vld [vmem:[%s762] sm:$0xf]
    %v764 = vld [vmem:[%s762 + $0x4] sm:$0xf]
    %v765 = vld [vmem:[%s762 + $0x8] sm:$0xf]
    %v766 = vld [vmem:[%s762 + $0xc] sm:$0xf]
    %v771 = vunpack.c.l.b16 %v763
    %v772 = vunpack.c.l.b16 %v764
    %v773 = vunpack.c.l.b16 %v765
    %v774 = vunpack.c.l.b16 %v766
    %v775 = vpack.c.b16 %v772, %v771
    %v776 = vpack.c.b16 %v774, %v773
    %v780 = vsel %vm539, %v761, 0
    %782 = vmatpush.bf16.msra.mxu0 0
    %783 = vmatpush.bf16.msra.mxu0 0
    %784 = vmatpush.bf16.msra.mxu0 0
    %785 = vmatpush.bf16.msra.mxu0 0
    %786 = vmatpush.bf16.msra.mxu0 0
    %787 = vmatpush.bf16.msra.mxu0 0
    %788 = vmatpush.bf16.msra.mxu0 %v776
    %789 = vmatpush.bf16.msra.mxu0 %v775
    %790 = vmatmul.bf16.gmra.mxu0 %v780
    %v791 = vpop.f32.mrf.mxu0
    %v792 = vadd.f32 0.0, %v791
    %v793 = vpop.f32.mrf.mxu0
    %794 = vdwg.mxu0
    %v795 = vadd.f32 %v689, %v792
    %796 = vset.pattern.permute.xlu0 4
    %797 = vperm.xlu0 %796, %v112
    %v798 = vpop.permute.xlu0 %797
    %vm799 = vcmp.eq.s32.totalorder %v798, %v114
    %vm800 = vcmp.eq.s32.totalorder %v798, %v115
    %vm801 = vcmp.eq.s32.totalorder %v798, %v116
    %vm802 = vcmp.eq.s32.totalorder %v798, %v117
    %v803 = vsel %vm799, 1, 0
    %v804 = vsel %vm800, 1, 0
    %v805 = vsel %vm801, 1, 0
    %v806 = vsel %vm802, 1, 0
    %v807 = vcvt.s32.f32 %v803
    %v808 = vcvt.s32.f32 %v804
    %v809 = vcvt.s32.f32 %v805
    %v810 = vcvt.s32.f32 %v806
    %v811 = vpack.c.bf16 %v807, %v807
    %v812 = vpack.c.bf16 %v808, %v808
    %v813 = vpack.c.bf16 %v809, %v809
    %v814 = vpack.c.bf16 %v810, %v810
    %815 = vmatpush.bf16.msra.mxu0 %v336
    %816 = vmatpush.bf16.msra.mxu0 %v335
    %817 = vmatpush.bf16.msra.mxu0 %v334
    %818 = vmatpush.bf16.msra.mxu0 %v333
    %819 = vmatpush.bf16.msra.mxu0 %v332
    %820 = vmatpush.bf16.msra.mxu0 %v331
    %821 = vmatpush.bf16.msra.mxu0 %v330
    %822 = vmatpush.bf16.msra.mxu0 %v329
    %823 = vmatmul.bf16.gmra.mxu0 %v811
    %v824 = vpop.f32.mrf.mxu0
    %v825 = vadd.f32 0.0, %v824
    %v826 = vpop.f32.mrf.mxu0
    %827 = vdwg.mxu0
    %828 = vmatpush.bf16.msra.mxu0 %v344
    %829 = vmatpush.bf16.msra.mxu0 %v343
    %830 = vmatpush.bf16.msra.mxu0 %v342
    %831 = vmatpush.bf16.msra.mxu0 %v341
    %832 = vmatpush.bf16.msra.mxu0 %v340
    %833 = vmatpush.bf16.msra.mxu0 %v339
    %834 = vmatpush.bf16.msra.mxu0 %v338
    %835 = vmatpush.bf16.msra.mxu0 %v337
    %836 = vmatmul.bf16.gmra.mxu0 %v812
    %v837 = vpop.f32.mrf.mxu0
    %v838 = vadd.f32 %v825, %v837
    %v839 = vpop.f32.mrf.mxu0
    %840 = vdwg.mxu0
    %841 = vmatpush.bf16.msra.mxu0 %v352
    %842 = vmatpush.bf16.msra.mxu0 %v351
    %843 = vmatpush.bf16.msra.mxu0 %v350
    %844 = vmatpush.bf16.msra.mxu0 %v349
    %845 = vmatpush.bf16.msra.mxu0 %v348
    %846 = vmatpush.bf16.msra.mxu0 %v347
    %847 = vmatpush.bf16.msra.mxu0 %v346
    %848 = vmatpush.bf16.msra.mxu0 %v345
    %849 = vmatmul.bf16.gmra.mxu0 %v813
    %v850 = vpop.f32.mrf.mxu0
    %v851 = vadd.f32 %v838, %v850
    %v852 = vpop.f32.mrf.mxu0
    %853 = vdwg.mxu0
    %854 = vmatpush.bf16.msra.mxu0 %v360
    %855 = vmatpush.bf16.msra.mxu0 %v359
    %856 = vmatpush.bf16.msra.mxu0 %v358
    %857 = vmatpush.bf16.msra.mxu0 %v357
    %858 = vmatpush.bf16.msra.mxu0 %v356
    %859 = vmatpush.bf16.msra.mxu0 %v355
    %860 = vmatpush.bf16.msra.mxu0 %v354
    %861 = vmatpush.bf16.msra.mxu0 %v353
    %862 = vmatmul.bf16.gmra.mxu0 %v814
    %v863 = vpop.f32.mrf.mxu0
    %v864 = vadd.f32 %v851, %v863
    %v865 = vpop.f32.mrf.mxu0
    %866 = vdwg.mxu0
    %v867 = vpack.c.bf16 %v864, %v864
    %s868 = scalar_lea.vmem %s2, 64
    %v869 = vld [vmem:[%s868] sm:$0xf]
    %v870 = vld [vmem:[%s868 + $0x4] sm:$0xf]
    %v871 = vld [vmem:[%s868 + $0x8] sm:$0xf]
    %v872 = vld [vmem:[%s868 + $0xc] sm:$0xf]
    %v877 = vunpack.c.l.b16 %v869
    %v878 = vunpack.c.l.b16 %v870
    %v879 = vunpack.c.l.b16 %v871
    %v880 = vunpack.c.l.b16 %v872
    %v881 = vpack.c.b16 %v878, %v877
    %v882 = vpack.c.b16 %v880, %v879
    %v886 = vsel %vm539, %v867, 0
    %888 = vmatpush.bf16.msra.mxu0 0
    %889 = vmatpush.bf16.msra.mxu0 0
    %890 = vmatpush.bf16.msra.mxu0 0
    %891 = vmatpush.bf16.msra.mxu0 0
    %892 = vmatpush.bf16.msra.mxu0 0
    %893 = vmatpush.bf16.msra.mxu0 0
    %894 = vmatpush.bf16.msra.mxu0 %v882
    %895 = vmatpush.bf16.msra.mxu0 %v881
    %896 = vmatmul.bf16.gmra.mxu0 %v886
    %v897 = vpop.f32.mrf.mxu0
    %v898 = vadd.f32 0.0, %v897
    %v899 = vpop.f32.mrf.mxu0
    %900 = vdwg.mxu0
    %v901 = vadd.f32 %v795, %v898
    %902 = vset.pattern.permute.xlu0 5
    %903 = vperm.xlu0 %902, %v112
    %v904 = vpop.permute.xlu0 %903
    %vm905 = vcmp.eq.s32.totalorder %v904, %v114
    %vm906 = vcmp.eq.s32.totalorder %v904, %v115
    %vm907 = vcmp.eq.s32.totalorder %v904, %v116
    %vm908 = vcmp.eq.s32.totalorder %v904, %v117
    %v909 = vsel %vm905, 1, 0
    %v910 = vsel %vm906, 1, 0
    %v911 = vsel %vm907, 1, 0
    %v912 = vsel %vm908, 1, 0
    %v913 = vcvt.s32.f32 %v909
    %v914 = vcvt.s32.f32 %v910
    %v915 = vcvt.s32.f32 %v911
    %v916 = vcvt.s32.f32 %v912
    %v917 = vpack.c.bf16 %v913, %v913
    %v918 = vpack.c.bf16 %v914, %v914
    %v919 = vpack.c.bf16 %v915, %v915
    %v920 = vpack.c.bf16 %v916, %v916
    %921 = vmatpush.bf16.msra.mxu0 %v336
    %922 = vmatpush.bf16.msra.mxu0 %v335
    %923 = vmatpush.bf16.msra.mxu0 %v334
    %924 = vmatpush.bf16.msra.mxu0 %v333
    %925 = vmatpush.bf16.msra.mxu0 %v332
    %926 = vmatpush.bf16.msra.mxu0 %v331
    %927 = vmatpush.bf16.msra.mxu0 %v330
    %928 = vmatpush.bf16.msra.mxu0 %v329
    %929 = vmatmul.bf16.gmra.mxu0 %v917
    %v930 = vpop.f32.mrf.mxu0
    %v931 = vadd.f32 0.0, %v930
    %v932 = vpop.f32.mrf.mxu0
    %933 = vdwg.mxu0
    %934 = vmatpush.bf16.msra.mxu0 %v344
    %935 = vmatpush.bf16.msra.mxu0 %v343
    %936 = vmatpush.bf16.msra.mxu0 %v342
    %937 = vmatpush.bf16.msra.mxu0 %v341
    %938 = vmatpush.bf16.msra.mxu0 %v340
    %939 = vmatpush.bf16.msra.mxu0 %v339
    %940 = vmatpush.bf16.msra.mxu0 %v338
    %941 = vmatpush.bf16.msra.mxu0 %v337
    %942 = vmatmul.bf16.gmra.mxu0 %v918
    %v943 = vpop.f32.mrf.mxu0
    %v944 = vadd.f32 %v931, %v943
    %v945 = vpop.f32.mrf.mxu0
    %946 = vdwg.mxu0
    %947 = vmatpush.bf16.msra.mxu0 %v352
    %948 = vmatpush.bf16.msra.mxu0 %v351
    %949 = vmatpush.bf16.msra.mxu0 %v350
    %950 = vmatpush.bf16.msra.mxu0 %v349
    %951 = vmatpush.bf16.msra.mxu0 %v348
    %952 = vmatpush.bf16.msra.mxu0 %v347
    %953 = vmatpush.bf16.msra.mxu0 %v346
    %954 = vmatpush.bf16.msra.mxu0 %v345
    %955 = vmatmul.bf16.gmra.mxu0 %v919
    %v956 = vpop.f32.mrf.mxu0
    %v957 = vadd.f32 %v944, %v956
    %v958 = vpop.f32.mrf.mxu0
    %959 = vdwg.mxu0
    %960 = vmatpush.bf16.msra.mxu0 %v360
    %961 = vmatpush.bf16.msra.mxu0 %v359
    %962 = vmatpush.bf16.msra.mxu0 %v358
    %963 = vmatpush.bf16.msra.mxu0 %v357
    %964 = vmatpush.bf16.msra.mxu0 %v356
    %965 = vmatpush.bf16.msra.mxu0 %v355
    %966 = vmatpush.bf16.msra.mxu0 %v354
    %967 = vmatpush.bf16.msra.mxu0 %v353
    %968 = vmatmul.bf16.gmra.mxu0 %v920
    %v969 = vpop.f32.mrf.mxu0
    %v970 = vadd.f32 %v957, %v969
    %v971 = vpop.f32.mrf.mxu0
    %972 = vdwg.mxu0
    %v973 = vpack.c.bf16 %v970, %v970
    %s974 = scalar_lea.vmem %s2, 80
    %v975 = vld [vmem:[%s974] sm:$0xf]
    %v976 = vld [vmem:[%s974 + $0x4] sm:$0xf]
    %v977 = vld [vmem:[%s974 + $0x8] sm:$0xf]
    %v978 = vld [vmem:[%s974 + $0xc] sm:$0xf]
    %v983 = vunpack.c.l.b16 %v975
    %v984 = vunpack.c.l.b16 %v976
    %v985 = vunpack.c.l.b16 %v977
    %v986 = vunpack.c.l.b16 %v978
    %v987 = vpack.c.b16 %v984, %v983
    %v988 = vpack.c.b16 %v986, %v985
    %v992 = vsel %vm539, %v973, 0
    %994 = vmatpush.bf16.msra.mxu0 0
    %995 = vmatpush.bf16.msra.mxu0 0
    %996 = vmatpush.bf16.msra.mxu0 0
    %997 = vmatpush.bf16.msra.mxu0 0
    %998 = vmatpush.bf16.msra.mxu0 0
    %999 = vmatpush.bf16.msra.mxu0 0
    %1000 = vmatpush.bf16.msra.mxu0 %v988
    %1001 = vmatpush.bf16.msra.mxu0 %v987
    %1002 = vmatmul.bf16.gmra.mxu0 %v992
    %v1003 = vpop.f32.mrf.mxu0
    %v1004 = vadd.f32 0.0, %v1003
    %v1005 = vpop.f32.mrf.mxu0
    %1006 = vdwg.mxu0
    %v1007 = vadd.f32 %v901, %v1004
    %1008 = vset.pattern.permute.xlu0 6
    %1009 = vperm.xlu0 %1008, %v112
    %v1010 = vpop.permute.xlu0 %1009
    %vm1011 = vcmp.eq.s32.totalorder %v1010, %v114
    %vm1012 = vcmp.eq.s32.totalorder %v1010, %v115
    %vm1013 = vcmp.eq.s32.totalorder %v1010, %v116
    %vm1014 = vcmp.eq.s32.totalorder %v1010, %v117
    %v1015 = vsel %vm1011, 1, 0
    %v1016 = vsel %vm1012, 1, 0
    %v1017 = vsel %vm1013, 1, 0
    %v1018 = vsel %vm1014, 1, 0
    %v1019 = vcvt.s32.f32 %v1015
    %v1020 = vcvt.s32.f32 %v1016
    %v1021 = vcvt.s32.f32 %v1017
    %v1022 = vcvt.s32.f32 %v1018
    %v1023 = vpack.c.bf16 %v1019, %v1019
    %v1024 = vpack.c.bf16 %v1020, %v1020
    %v1025 = vpack.c.bf16 %v1021, %v1021
    %v1026 = vpack.c.bf16 %v1022, %v1022
    %1027 = vmatpush.bf16.msra.mxu0 %v336
    %1028 = vmatpush.bf16.msra.mxu0 %v335
    %1029 = vmatpush.bf16.msra.mxu0 %v334
    %1030 = vmatpush.bf16.msra.mxu0 %v333
    %1031 = vmatpush.bf16.msra.mxu0 %v332
    %1032 = vmatpush.bf16.msra.mxu0 %v331
    %1033 = vmatpush.bf16.msra.mxu0 %v330
    %1034 = vmatpush.bf16.msra.mxu0 %v329
    %1035 = vmatmul.bf16.gmra.mxu0 %v1023
    %v1036 = vpop.f32.mrf.mxu0
    %v1037 = vadd.f32 0.0, %v1036
    %v1038 = vpop.f32.mrf.mxu0
    %1039 = vdwg.mxu0
    %1040 = vmatpush.bf16.msra.mxu0 %v344
    %1041 = vmatpush.bf16.msra.mxu0 %v343
    %1042 = vmatpush.bf16.msra.mxu0 %v342
    %1043 = vmatpush.bf16.msra.mxu0 %v341
    %1044 = vmatpush.bf16.msra.mxu0 %v340
    %1045 = vmatpush.bf16.msra.mxu0 %v339
    %1046 = vmatpush.bf16.msra.mxu0 %v338
    %1047 = vmatpush.bf16.msra.mxu0 %v337
    %1048 = vmatmul.bf16.gmra.mxu0 %v1024
    %v1049 = vpop.f32.mrf.mxu0
    %v1050 = vadd.f32 %v1037, %v1049
    %v1051 = vpop.f32.mrf.mxu0
    %1052 = vdwg.mxu0
    %1053 = vmatpush.bf16.msra.mxu0 %v352
    %1054 = vmatpush.bf16.msra.mxu0 %v351
    %1055 = vmatpush.bf16.msra.mxu0 %v350
    %1056 = vmatpush.bf16.msra.mxu0 %v349
    %1057 = vmatpush.bf16.msra.mxu0 %v348
    %1058 = vmatpush.bf16.msra.mxu0 %v347
    %1059 = vmatpush.bf16.msra.mxu0 %v346
    %1060 = vmatpush.bf16.msra.mxu0 %v345
    %1061 = vmatmul.bf16.gmra.mxu0 %v1025
    %v1062 = vpop.f32.mrf.mxu0
    %v1063 = vadd.f32 %v1050, %v1062
    %v1064 = vpop.f32.mrf.mxu0
    %1065 = vdwg.mxu0
    %1066 = vmatpush.bf16.msra.mxu0 %v360
    %1067 = vmatpush.bf16.msra.mxu0 %v359
    %1068 = vmatpush.bf16.msra.mxu0 %v358
    %1069 = vmatpush.bf16.msra.mxu0 %v357
    %1070 = vmatpush.bf16.msra.mxu0 %v356
    %1071 = vmatpush.bf16.msra.mxu0 %v355
    %1072 = vmatpush.bf16.msra.mxu0 %v354
    %1073 = vmatpush.bf16.msra.mxu0 %v353
    %1074 = vmatmul.bf16.gmra.mxu0 %v1026
    %v1075 = vpop.f32.mrf.mxu0
    %v1076 = vadd.f32 %v1063, %v1075
    %v1077 = vpop.f32.mrf.mxu0
    %1078 = vdwg.mxu0
    %v1079 = vpack.c.bf16 %v1076, %v1076
    %s1080 = scalar_lea.vmem %s2, 96
    %v1081 = vld [vmem:[%s1080] sm:$0xf]
    %v1082 = vld [vmem:[%s1080 + $0x4] sm:$0xf]
    %v1083 = vld [vmem:[%s1080 + $0x8] sm:$0xf]
    %v1084 = vld [vmem:[%s1080 + $0xc] sm:$0xf]
    %v1089 = vunpack.c.l.b16 %v1081
    %v1090 = vunpack.c.l.b16 %v1082
    %v1091 = vunpack.c.l.b16 %v1083
    %v1092 = vunpack.c.l.b16 %v1084
    %v1093 = vpack.c.b16 %v1090, %v1089
    %v1094 = vpack.c.b16 %v1092, %v1091
    %v1098 = vsel %vm539, %v1079, 0
    %1100 = vmatpush.bf16.msra.mxu0 0
    %1101 = vmatpush.bf16.msra.mxu0 0
    %1102 = vmatpush.bf16.msra.mxu0 0
    %1103 = vmatpush.bf16.msra.mxu0 0
    %1104 = vmatpush.bf16.msra.mxu0 0
    %1105 = vmatpush.bf16.msra.mxu0 0
    %1106 = vmatpush.bf16.msra.mxu0 %v1094
    %1107 = vmatpush.bf16.msra.mxu0 %v1093
    %1108 = vmatmul.bf16.gmra.mxu0 %v1098
    %v1109 = vpop.f32.mrf.mxu0
    %v1110 = vadd.f32 0.0, %v1109
    %v1111 = vpop.f32.mrf.mxu0
    %1112 = vdwg.mxu0
    %v1113 = vadd.f32 %v1007, %v1110
    %1114 = vset.pattern.permute.xlu0 7
    %1115 = vperm.xlu0 %1114, %v112
    %v1116 = vpop.permute.xlu0 %1115
    %vm1117 = vcmp.eq.s32.totalorder %v1116, %v114
    %vm1118 = vcmp.eq.s32.totalorder %v1116, %v115
    %vm1119 = vcmp.eq.s32.totalorder %v1116, %v116
    %vm1120 = vcmp.eq.s32.totalorder %v1116, %v117
    %v1121 = vsel %vm1117, 1, 0
    %v1122 = vsel %vm1118, 1, 0
    %v1123 = vsel %vm1119, 1, 0
    %v1124 = vsel %vm1120, 1, 0
    %v1125 = vcvt.s32.f32 %v1121
    %v1126 = vcvt.s32.f32 %v1122
    %v1127 = vcvt.s32.f32 %v1123
    %v1128 = vcvt.s32.f32 %v1124
    %v1129 = vpack.c.bf16 %v1125, %v1125
    %v1130 = vpack.c.bf16 %v1126, %v1126
    %v1131 = vpack.c.bf16 %v1127, %v1127
    %v1132 = vpack.c.bf16 %v1128, %v1128
    %1133 = vmatpush.bf16.msra.mxu0 %v336
    %1134 = vmatpush.bf16.msra.mxu0 %v335
    %1135 = vmatpush.bf16.msra.mxu0 %v334
    %1136 = vmatpush.bf16.msra.mxu0 %v333
    %1137 = vmatpush.bf16.msra.mxu0 %v332
    %1138 = vmatpush.bf16.msra.mxu0 %v331
    %1139 = vmatpush.bf16.msra.mxu0 %v330
    %1140 = vmatpush.bf16.msra.mxu0 %v329
    %1141 = vmatmul.bf16.gmra.mxu0 %v1129
    %v1142 = vpop.f32.mrf.mxu0
    %v1143 = vadd.f32 0.0, %v1142
    %v1144 = vpop.f32.mrf.mxu0
    %1145 = vdwg.mxu0
    %1146 = vmatpush.bf16.msra.mxu0 %v344
    %1147 = vmatpush.bf16.msra.mxu0 %v343
    %1148 = vmatpush.bf16.msra.mxu0 %v342
    %1149 = vmatpush.bf16.msra.mxu0 %v341
    %1150 = vmatpush.bf16.msra.mxu0 %v340
    %1151 = vmatpush.bf16.msra.mxu0 %v339
    %1152 = vmatpush.bf16.msra.mxu0 %v338
    %1153 = vmatpush.bf16.msra.mxu0 %v337
    %1154 = vmatmul.bf16.gmra.mxu0 %v1130
    %v1155 = vpop.f32.mrf.mxu0
    %v1156 = vadd.f32 %v1143, %v1155
    %v1157 = vpop.f32.mrf.mxu0
    %1158 = vdwg.mxu0
    %1159 = vmatpush.bf16.msra.mxu0 %v352
    %1160 = vmatpush.bf16.msra.mxu0 %v351
    %1161 = vmatpush.bf16.msra.mxu0 %v350
    %1162 = vmatpush.bf16.msra.mxu0 %v349
    %1163 = vmatpush.bf16.msra.mxu0 %v348
    %1164 = vmatpush.bf16.msra.mxu0 %v347
    %1165 = vmatpush.bf16.msra.mxu0 %v346
    %1166 = vmatpush.bf16.msra.mxu0 %v345
    %1167 = vmatmul.bf16.gmra.mxu0 %v1131
    %v1168 = vpop.f32.mrf.mxu0
    %v1169 = vadd.f32 %v1156, %v1168
    %v1170 = vpop.f32.mrf.mxu0
    %1171 = vdwg.mxu0
    %1172 = vmatpush.bf16.msra.mxu0 %v360
    %1173 = vmatpush.bf16.msra.mxu0 %v359
    %1174 = vmatpush.bf16.msra.mxu0 %v358
    %1175 = vmatpush.bf16.msra.mxu0 %v357
    %1176 = vmatpush.bf16.msra.mxu0 %v356
    %1177 = vmatpush.bf16.msra.mxu0 %v355
    %1178 = vmatpush.bf16.msra.mxu0 %v354
    %1179 = vmatpush.bf16.msra.mxu0 %v353
    %1180 = vmatmul.bf16.gmra.mxu0 %v1132
    %v1181 = vpop.f32.mrf.mxu0
    %v1182 = vadd.f32 %v1169, %v1181
    %v1183 = vpop.f32.mrf.mxu0
    %1184 = vdwg.mxu0
    %v1185 = vpack.c.bf16 %v1182, %v1182
    %s1186 = scalar_lea.vmem %s2, 112
    %v1187 = vld [vmem:[%s1186] sm:$0xf]
    %v1188 = vld [vmem:[%s1186 + $0x4] sm:$0xf]
    %v1189 = vld [vmem:[%s1186 + $0x8] sm:$0xf]
    %v1190 = vld [vmem:[%s1186 + $0xc] sm:$0xf]
    %v1195 = vunpack.c.l.b16 %v1187
    %v1196 = vunpack.c.l.b16 %v1188
    %v1197 = vunpack.c.l.b16 %v1189
    %v1198 = vunpack.c.l.b16 %v1190
    %v1199 = vpack.c.b16 %v1196, %v1195
    %v1200 = vpack.c.b16 %v1198, %v1197
    %v1204 = vsel %vm539, %v1185, 0
    %1206 = vmatpush.bf16.msra.mxu0 0
    %1207 = vmatpush.bf16.msra.mxu0 0
    %1208 = vmatpush.bf16.msra.mxu0 0
    %1209 = vmatpush.bf16.msra.mxu0 0
    %1210 = vmatpush.bf16.msra.mxu0 0
    %1211 = vmatpush.bf16.msra.mxu0 0
    %1212 = vmatpush.bf16.msra.mxu0 %v1200
    %1213 = vmatpush.bf16.msra.mxu0 %v1199
    %1214 = vmatmul.bf16.gmra.mxu0 %v1204
    %v1215 = vpop.f32.mrf.mxu0
    %v1216 = vadd.f32 0.0, %v1215
    %v1217 = vpop.f32.mrf.mxu0
    %1218 = vdwg.mxu0
    %v1219 = vadd.f32 %v1113, %v1216
    %v1220 = vld [vmem:[#allocation5] sm:$0x1]
    %v1222 = vperm.slane %v1220, 0
    %v1224 = vadd.f32 %v1219, %v1222
    %v1225 = vtanh.pop %v1224
    %v1226 = vld [vmem:[%s4] sm:$0x1]
    %v1227 = vld [vmem:[#allocation7] sm:$0x1]
    %1228 = vadd.xlane.f32.xlu0 %v1225
    %v1229 = vpop.xlane.xlu0 %1228
    %v1230 = vrcp.pop 128.0
    %v1231 = vmul.f32 128.0, %v1230
    %v1232 = vsub.f32 1.0, %v1231
    %v1233 = vmul.f32 %v1230, %v1232
    %v1234 = vadd.f32 %v1230, %v1233
    %vm1235 = vweird.f32 %v1230
    %v1236 = vsel %vm1235, %v1230, %v1234
    %v1237 = vmul.f32 %v1229, %v1236
    %v1238 = vmul.f32 %v1225, %v1225
    %1239 = vadd.xlane.f32.xlu0 %v1238
    %v1240 = vpop.xlane.xlu0 %1239
    %v1241 = vmul.f32 %v1240, %v1236
    %v1242 = vmul.f32 %v1237, %v1237
    %v1243 = vsub.f32 %v1241, %v1242
    %v1244 = vmax.f32 %v1243, 0.0
    %v1245 = vsub.f32 %v1225, %v1237
    %v1246 = vadd.f32 %v1244, 1e-05
    %v1247 = vrsqrt.pop %v1246
    %v1248 = vmul.f32 %v1247, %v1246
    %v1249 = vmul.f32 %v1248, %v1247
    %v1250 = vmul.f32 0.5, %v1249
    %v1251 = vsub.f32 1.5, %v1250
    %v1252 = vmul.f32 %v1247, %v1251
    %vm1253 = vweird.f32 %v1246
    %vm1254 = vweird.f32 %v1247
    %vm1255 = vmor %vm1253, %vm1254
    %v1256 = vsel %vm1255, %v1247, %v1252
    %v1257 = vmul.f32 %v1245, %v1256
    %v1259 = vperm.slane %v1226, 0
    %v1261 = vmul.f32 %v1257, %v1259
    %v1263 = vperm.slane %v1227, 0
    %v1265 = vadd.f32 %v1261, %v1263
    %v1266 = vpack.c.bf16 %v1265, %v1265
    %v1267 = vld [vmem:[%s6] sm:$0xf]
    %v1268 = vld [vmem:[%s6 + $0x4] sm:$0xf]
    %v1269 = vld [vmem:[%s6 + $0x8] sm:$0xf]
    %v1270 = vld [vmem:[%s6 + $0xc] sm:$0xf]
    %v1271 = vld [vmem:[%s6 + $0x10] sm:$0xf]
    %v1272 = vld [vmem:[%s6 + $0x14] sm:$0xf]
    %v1273 = vld [vmem:[%s6 + $0x18] sm:$0xf]
    %v1274 = vld [vmem:[%s6 + $0x1c] sm:$0xf]
    %v1275 = vld [vmem:[%s6 + $0x20] sm:$0xf]
    %v1276 = vld [vmem:[%s6 + $0x24] sm:$0xf]
    %v1277 = vld [vmem:[%s6 + $0x28] sm:$0xf]
    %v1278 = vld [vmem:[%s6 + $0x2c] sm:$0xf]
    %v1279 = vld [vmem:[%s6 + $0x30] sm:$0xf]
    %v1280 = vld [vmem:[%s6 + $0x34] sm:$0xf]
    %v1281 = vld [vmem:[%s6 + $0x38] sm:$0xf]
    %v1282 = vld [vmem:[%s6 + $0x3c] sm:$0xf]
    %v1283 = vld [vmem:[#allocation8] sm:$0x1]
    %v1285 = vperm.slane %v1283, 0
    %v1303 = vunpack.c.l.b16 %v1267
    %v1304 = vunpack.c.l.b16 %v1268
    %v1305 = vunpack.c.l.b16 %v1269
    %v1306 = vunpack.c.l.b16 %v1270
    %v1307 = vunpack.c.l.b16 %v1271
    %v1308 = vunpack.c.l.b16 %v1272
    %v1309 = vunpack.c.l.b16 %v1273
    %v1310 = vunpack.c.l.b16 %v1274
    %v1311 = vunpack.c.l.b16 %v1275
    %v1312 = vunpack.c.l.b16 %v1276
    %v1313 = vunpack.c.l.b16 %v1277
    %v1314 = vunpack.c.l.b16 %v1278
    %v1315 = vunpack.c.l.b16 %v1279
    %v1316 = vunpack.c.l.b16 %v1280
    %v1317 = vunpack.c.l.b16 %v1281
    %v1318 = vunpack.c.l.b16 %v1282
    %v1319 = vpack.c.b16 %v1304, %v1303
    %v1320 = vpack.c.b16 %v1306, %v1305
    %v1321 = vpack.c.b16 %v1308, %v1307
    %v1322 = vpack.c.b16 %v1310, %v1309
    %v1323 = vpack.c.b16 %v1312, %v1311
    %v1324 = vpack.c.b16 %v1314, %v1313
    %v1325 = vpack.c.b16 %v1316, %v1315
    %v1326 = vpack.c.b16 %v1318, %v1317
    %1335 = vmatpush.bf16.msra.mxu0 %v1326
    %1336 = vmatpush.bf16.msra.mxu0 %v1325
    %1337 = vmatpush.bf16.msra.mxu0 %v1324
    %1338 = vmatpush.bf16.msra.mxu0 %v1323
    %1339 = vmatpush.bf16.msra.mxu0 %v1322
    %1340 = vmatpush.bf16.msra.mxu0 %v1321
    %1341 = vmatpush.bf16.msra.mxu0 %v1320
    %1342 = vmatpush.bf16.msra.mxu0 %v1319
    %1343 = vmatmul.bf16.gmra.mxu0 %v1266
    %v1344 = vpop.f32.mrf.mxu0
    %v1345 = vadd.f32 %v1285, %v1344
    %v1346 = vpop.f32.mrf.mxu0
    %1347 = vdwg.mxu0
    %v1348 = vtanh.pop %v1345
    %v1349 = vadd.f32 %v1348, %v1265
    %v1350 = vld [vmem:[%s8] sm:$0x1]
    %v1351 = vld [vmem:[#allocation10] sm:$0x1]
    %1352 = vadd.xlane.f32.xlu0 %v1349
    %v1353 = vpop.xlane.xlu0 %1352
    %v1354 = vmul.f32 %v1353, %v1236
    %v1355 = vmul.f32 %v1349, %v1349
    %1356 = vadd.xlane.f32.xlu0 %v1355
    %v1357 = vpop.xlane.xlu0 %1356
    %v1358 = vmul.f32 %v1357, %v1236
    %v1359 = vmul.f32 %v1354, %v1354
    %v1360 = vsub.f32 %v1358, %v1359
    %v1361 = vmax.f32 %v1360, 0.0
    %v1362 = vsub.f32 %v1349, %v1354
    %v1363 = vadd.f32 %v1361, 1e-05
    %v1364 = vrsqrt.pop %v1363
    %v1365 = vmul.f32 %v1364, %v1363
    %v1366 = vmul.f32 %v1365, %v1364
    %v1367 = vmul.f32 0.5, %v1366
    %v1368 = vsub.f32 1.5, %v1367
    %v1369 = vmul.f32 %v1364, %v1368
    %vm1370 = vweird.f32 %v1363
    %vm1371 = vweird.f32 %v1364
    %vm1372 = vmor %vm1370, %vm1371
    %v1373 = vsel %vm1372, %v1364, %v1369
    %v1374 = vmul.f32 %v1362, %v1373
    %v1376 = vperm.slane %v1350, 0
    %v1378 = vmul.f32 %v1374, %v1376
    %v1380 = vperm.slane %v1351, 0
    %v1382 = vadd.f32 %v1378, %v1380
    %v1383 = vmax.f32 %v1382, 0.0
    %v1384 = vpack.c.bf16 %v1383, %v1383
    %s1385 = scalar_lea.vmem %s6, 64
    %v1386 = vld [vmem:[%s1385] sm:$0xf]
    %v1387 = vld [vmem:[%s1385 + $0x4] sm:$0xf]
    %v1388 = vld [vmem:[%s1385 + $0x8] sm:$0xf]
    %v1389 = vld [vmem:[%s1385 + $0xc] sm:$0xf]
    %v1390 = vld [vmem:[%s1385 + $0x10] sm:$0xf]
    %v1391 = vld [vmem:[%s1385 + $0x14] sm:$0xf]
    %v1392 = vld [vmem:[%s1385 + $0x18] sm:$0xf]
    %v1393 = vld [vmem:[%s1385 + $0x1c] sm:$0xf]
    %v1394 = vld [vmem:[%s1385 + $0x20] sm:$0xf]
    %v1395 = vld [vmem:[%s1385 + $0x24] sm:$0xf]
    %v1396 = vld [vmem:[%s1385 + $0x28] sm:$0xf]
    %v1397 = vld [vmem:[%s1385 + $0x2c] sm:$0xf]
    %v1398 = vld [vmem:[%s1385 + $0x30] sm:$0xf]
    %v1399 = vld [vmem:[%s1385 + $0x34] sm:$0xf]
    %v1400 = vld [vmem:[%s1385 + $0x38] sm:$0xf]
    %v1401 = vld [vmem:[%s1385 + $0x3c] sm:$0xf]
    %s1402 = scalar_lea.vmem [#allocation8], 1
    %v1403 = vld [vmem:[%s1402] sm:$0x1]
    %v1405 = vperm.slane %v1403, 0
    %v1423 = vunpack.c.l.b16 %v1386
    %v1424 = vunpack.c.l.b16 %v1387
    %v1425 = vunpack.c.l.b16 %v1388
    %v1426 = vunpack.c.l.b16 %v1389
    %v1427 = vunpack.c.l.b16 %v1390
    %v1428 = vunpack.c.l.b16 %v1391
    %v1429 = vunpack.c.l.b16 %v1392
    %v1430 = vunpack.c.l.b16 %v1393
    %v1431 = vunpack.c.l.b16 %v1394
    %v1432 = vunpack.c.l.b16 %v1395
    %v1433 = vunpack.c.l.b16 %v1396
    %v1434 = vunpack.c.l.b16 %v1397
    %v1435 = vunpack.c.l.b16 %v1398
    %v1436 = vunpack.c.l.b16 %v1399
    %v1437 = vunpack.c.l.b16 %v1400
    %v1438 = vunpack.c.l.b16 %v1401
    %v1439 = vpack.c.b16 %v1424, %v1423
    %v1440 = vpack.c.b16 %v1426, %v1425
    %v1441 = vpack.c.b16 %v1428, %v1427
    %v1442 = vpack.c.b16 %v1430, %v1429
    %v1443 = vpack.c.b16 %v1432, %v1431
    %v1444 = vpack.c.b16 %v1434, %v1433
    %v1445 = vpack.c.b16 %v1436, %v1435
    %v1446 = vpack.c.b16 %v1438, %v1437
    %1455 = vmatpush.bf16.msra.mxu0 %v1446
    %1456 = vmatpush.bf16.msra.mxu0 %v1445
    %1457 = vmatpush.bf16.msra.mxu0 %v1444
    %1458 = vmatpush.bf16.msra.mxu0 %v1443
    %1459 = vmatpush.bf16.msra.mxu0 %v1442
    %1460 = vmatpush.bf16.msra.mxu0 %v1441
    %1461 = vmatpush.bf16.msra.mxu0 %v1440
    %1462 = vmatpush.bf16.msra.mxu0 %v1439
    %1463 = vmatmul.bf16.gmra.mxu0 %v1384
    %v1464 = vpop.f32.mrf.mxu0
    %v1465 = vadd.f32 %v1405, %v1464
    %v1466 = vpop.f32.mrf.mxu0
    %1467 = vdwg.mxu0
    %v1468 = vtanh.pop %v1465
    %v1469 = vadd.f32 %v1468, %v1383
    %s1470 = scalar_lea.vmem %s8, 1
    %v1471 = vld [vmem:[%s1470] sm:$0x1]
    %s1472 = scalar_lea.vmem [#allocation10], 1
    %v1473 = vld [vmem:[%s1472] sm:$0x1]
    %1474 = vadd.xlane.f32.xlu0 %v1469
    %v1475 = vpop.xlane.xlu0 %1474
    %v1476 = vmul.f32 %v1475, %v1236
    %v1477 = vmul.f32 %v1469, %v1469
    %1478 = vadd.xlane.f32.xlu0 %v1477
    %v1479 = vpop.xlane.xlu0 %1478
    %v1480 = vmul.f32 %v1479, %v1236
    %v1481 = vmul.f32 %v1476, %v1476
    %v1482 = vsub.f32 %v1480, %v1481
    %v1483 = vmax.f32 %v1482, 0.0
    %v1484 = vsub.f32 %v1469, %v1476
    %v1485 = vadd.f32 %v1483, 1e-05
    %v1486 = vrsqrt.pop %v1485
    %v1487 = vmul.f32 %v1486, %v1485
    %v1488 = vmul.f32 %v1487, %v1486
    %v1489 = vmul.f32 0.5, %v1488
    %v1490 = vsub.f32 1.5, %v1489
    %v1491 = vmul.f32 %v1486, %v1490
    %vm1492 = vweird.f32 %v1485
    %vm1493 = vweird.f32 %v1486
    %vm1494 = vmor %vm1492, %vm1493
    %v1495 = vsel %vm1494, %v1486, %v1491
    %v1496 = vmul.f32 %v1484, %v1495
    %v1498 = vperm.slane %v1471, 0
    %v1500 = vmul.f32 %v1496, %v1498
    %v1502 = vperm.slane %v1473, 0
    %v1504 = vadd.f32 %v1500, %v1502
    %v1505 = vmax.f32 %v1504, 0.0
    %v1506 = vpack.c.bf16 %v1505, %v1505
    %v1507 = vld [vmem:[%s10] sm:$0xff]
    %v1508 = vld [vmem:[%s10 + $0x8] sm:$0xff]
    %v1509 = vld [vmem:[%s10 + $0x10] sm:$0xff]
    %v1510 = vld [vmem:[%s10 + $0x18] sm:$0xff]
    %v1511 = vld [vmem:[%s10 + $0x20] sm:$0xff]
    %v1512 = vld [vmem:[%s10 + $0x28] sm:$0xff]
    %v1513 = vld [vmem:[%s10 + $0x30] sm:$0xff]
    %v1514 = vld [vmem:[%s10 + $0x38] sm:$0xff]
    %v1515 = vld [vmem:[%s10 + $0x40] sm:$0xff]
    %v1516 = vld [vmem:[%s10 + $0x48] sm:$0xff]
    %v1517 = vld [vmem:[%s10 + $0x50] sm:$0xff]
    %v1518 = vld [vmem:[%s10 + $0x58] sm:$0xff]
    %v1519 = vld [vmem:[%s10 + $0x60] sm:$0xff]
    %v1520 = vld [vmem:[%s10 + $0x68] sm:$0xff]
    %v1521 = vld [vmem:[%s10 + $0x70] sm:$0xff]
    %v1522 = vld [vmem:[%s10 + $0x78] sm:$0xff]
    %v1523 = vld [vmem:[%s10 + $0x80] sm:$0xff]
    %v1524 = vld [vmem:[%s10 + $0x88] sm:$0xff]
    %v1525 = vld [vmem:[%s10 + $0x90] sm:$0xff]
    %v1526 = vld [vmem:[%s10 + $0x98] sm:$0xff]
    %v1527 = vld [vmem:[%s10 + $0xa0] sm:$0xff]
    %v1528 = vld [vmem:[%s10 + $0xa8] sm:$0xff]
    %v1529 = vld [vmem:[%s10 + $0xb0] sm:$0xff]
    %v1530 = vld [vmem:[%s10 + $0xb8] sm:$0xff]
    %v1531 = vld [vmem:[%s10 + $0xc0] sm:$0xff]
    %v1532 = vld [vmem:[%s10 + $0xc8] sm:$0xff]
    %v1533 = vld [vmem:[%s10 + $0xd0] sm:$0xff]
    %v1534 = vld [vmem:[%s10 + $0xd8] sm:$0xff]
    %v1535 = vld [vmem:[%s10 + $0xe0] sm:$0xff]
    %v1536 = vld [vmem:[%s10 + $0xe8] sm:$0xff]
    %v1537 = vld [vmem:[%s10 + $0xf0] sm:$0xff]
    %v1538 = vld [vmem:[%s10 + $0xf8] sm:$0xff]
    %v1571 = vunpack.c.l.b16 %v1507
    %v1572 = vunpack.c.h.b16 %v1507
    %v1573 = vunpack.c.l.b16 %v1508
    %v1574 = vunpack.c.h.b16 %v1508
    %v1575 = vunpack.c.l.b16 %v1509
    %v1576 = vunpack.c.h.b16 %v1509
    %v1577 = vunpack.c.l.b16 %v1510
    %v1578 = vunpack.c.h.b16 %v1510
    %v1579 = vunpack.c.l.b16 %v1511
    %v1580 = vunpack.c.h.b16 %v1511
    %v1581 = vunpack.c.l.b16 %v1512
    %v1582 = vunpack.c.h.b16 %v1512
    %v1583 = vunpack.c.l.b16 %v1513
    %v1584 = vunpack.c.h.b16 %v1513
    %v1585 = vunpack.c.l.b16 %v1514
    %v1586 = vunpack.c.h.b16 %v1514
    %v1587 = vunpack.c.l.b16 %v1515
    %v1588 = vunpack.c.h.b16 %v1515
    %v1589 = vunpack.c.l.b16 %v1516
    %v1590 = vunpack.c.h.b16 %v1516
    %v1591 = vunpack.c.l.b16 %v1517
    %v1592 = vunpack.c.h.b16 %v1517
    %v1593 = vunpack.c.l.b16 %v1518
    %v1594 = vunpack.c.h.b16 %v1518
    %v1595 = vunpack.c.l.b16 %v1519
    %v1596 = vunpack.c.h.b16 %v1519
    %v1597 = vunpack.c.l.b16 %v1520
    %v1598 = vunpack.c.h.b16 %v1520
    %v1599 = vunpack.c.l.b16 %v1521
    %v1600 = vunpack.c.h.b16 %v1521
    %v1601 = vunpack.c.l.b16 %v1522
    %v1602 = vunpack.c.h.b16 %v1522
    %v1603 = vunpack.c.l.b16 %v1523
    %v1604 = vunpack.c.h.b16 %v1523
    %v1605 = vunpack.c.l.b16 %v1524
    %v1606 = vunpack.c.h.b16 %v1524
    %v1607 = vunpack.c.l.b16 %v1525
    %v1608 = vunpack.c.h.b16 %v1525
    %v1609 = vunpack.c.l.b16 %v1526
    %v1610 = vunpack.c.h.b16 %v1526
    %v1611 = vunpack.c.l.b16 %v1527
    %v1612 = vunpack.c.h.b16 %v1527
    %v1613 = vunpack.c.l.b16 %v1528
    %v1614 = vunpack.c.h.b16 %v1528
    %v1615 = vunpack.c.l.b16 %v1529
    %v1616 = vunpack.c.h.b16 %v1529
    %v1617 = vunpack.c.l.b16 %v1530
    %v1618 = vunpack.c.h.b16 %v1530
    %v1619 = vunpack.c.l.b16 %v1531
    %v1620 = vunpack.c.h.b16 %v1531
    %v1621 = vunpack.c.l.b16 %v1532
    %v1622 = vunpack.c.h.b16 %v1532
    %v1623 = vunpack.c.l.b16 %v1533
    %v1624 = vunpack.c.h.b16 %v1533
    %v1625 = vunpack.c.l.b16 %v1534
    %v1626 = vunpack.c.h.b16 %v1534
    %v1627 = vunpack.c.l.b16 %v1535
    %v1628 = vunpack.c.h.b16 %v1535
    %v1629 = vunpack.c.l.b16 %v1536
    %v1630 = vunpack.c.h.b16 %v1536
    %v1631 = vunpack.c.l.b16 %v1537
    %v1632 = vunpack.c.h.b16 %v1537
    %v1633 = vunpack.c.l.b16 %v1538
    %v1634 = vunpack.c.h.b16 %v1538
    %v1635 = vpack.c.b16 %v1575, %v1571
    %v1636 = vpack.c.b16 %v1576, %v1572
    %v1637 = vpack.c.b16 %v1577, %v1573
    %v1638 = vpack.c.b16 %v1578, %v1574
    %v1639 = vpack.c.b16 %v1583, %v1579
    %v1640 = vpack.c.b16 %v1584, %v1580
    %v1641 = vpack.c.b16 %v1585, %v1581
    %v1642 = vpack.c.b16 %v1586, %v1582
    %v1643 = vpack.c.b16 %v1591, %v1587
    %v1644 = vpack.c.b16 %v1592, %v1588
    %v1645 = vpack.c.b16 %v1593, %v1589
    %v1646 = vpack.c.b16 %v1594, %v1590
    %v1647 = vpack.c.b16 %v1599, %v1595
    %v1648 = vpack.c.b16 %v1600, %v1596
    %v1649 = vpack.c.b16 %v1601, %v1597
    %v1650 = vpack.c.b16 %v1602, %v1598
    %v1651 = vpack.c.b16 %v1607, %v1603
    %v1652 = vpack.c.b16 %v1608, %v1604
    %v1653 = vpack.c.b16 %v1609, %v1605
    %v1654 = vpack.c.b16 %v1610, %v1606
    %v1655 = vpack.c.b16 %v1615, %v1611
    %v1656 = vpack.c.b16 %v1616, %v1612
    %v1657 = vpack.c.b16 %v1617, %v1613
    %v1658 = vpack.c.b16 %v1618, %v1614
    %v1659 = vpack.c.b16 %v1623, %v1619
    %v1660 = vpack.c.b16 %v1624, %v1620
    %v1661 = vpack.c.b16 %v1625, %v1621
    %v1662 = vpack.c.b16 %v1626, %v1622
    %v1663 = vpack.c.b16 %v1631, %v1627
    %v1664 = vpack.c.b16 %v1632, %v1628
    %v1665 = vpack.c.b16 %v1633, %v1629
    %v1666 = vpack.c.b16 %v1634, %v1630
    %1699 = vmatpush.bf16.msra.mxu0 %v1663
    %1700 = vmatpush.bf16.msra.mxu0 %v1659
    %1701 = vmatpush.bf16.msra.mxu0 %v1655
    %1702 = vmatpush.bf16.msra.mxu0 %v1651
    %1703 = vmatpush.bf16.msra.mxu0 %v1647
    %1704 = vmatpush.bf16.msra.mxu0 %v1643
    %1705 = vmatpush.bf16.msra.mxu0 %v1639
    %1706 = vmatpush.bf16.msra.mxu0 %v1635
    %1707 = vmatmul.bf16.gmra.mxu0 %v1506
    %v1708 = vpop.f32.mrf.mxu0
    %v1709 = vadd.f32 0.0, %v1708
    %v1710 = vpop.f32.mrf.mxu0
    %1711 = vdwg.mxu0
    %1712 = vmatpush.bf16.msra.mxu0 %v1664
    %1713 = vmatpush.bf16.msra.mxu0 %v1660
    %1714 = vmatpush.bf16.msra.mxu0 %v1656
    %1715 = vmatpush.bf16.msra.mxu0 %v1652
    %1716 = vmatpush.bf16.msra.mxu0 %v1648
    %1717 = vmatpush.bf16.msra.mxu0 %v1644
    %1718 = vmatpush.bf16.msra.mxu0 %v1640
    %1719 = vmatpush.bf16.msra.mxu0 %v1636
    %1720 = vmatmul.bf16.gmra.mxu0 %v1506
    %v1721 = vpop.f32.mrf.mxu0
    %v1722 = vadd.f32 0.0, %v1721
    %v1723 = vpop.f32.mrf.mxu0
    %1724 = vdwg.mxu0
    %1725 = vmatpush.bf16.msra.mxu0 %v1665
    %1726 = vmatpush.bf16.msra.mxu0 %v1661
    %1727 = vmatpush.bf16.msra.mxu0 %v1657
    %1728 = vmatpush.bf16.msra.mxu0 %v1653
    %1729 = vmatpush.bf16.msra.mxu0 %v1649
    %1730 = vmatpush.bf16.msra.mxu0 %v1645
    %1731 = vmatpush.bf16.msra.mxu0 %v1641
    %1732 = vmatpush.bf16.msra.mxu0 %v1637
    %1733 = vmatmul.bf16.gmra.mxu0 %v1506
    %v1734 = vpop.f32.mrf.mxu0
    %v1735 = vadd.f32 0.0, %v1734
    %v1736 = vpop.f32.mrf.mxu0
    %1737 = vdwg.mxu0
    %1738 = vmatpush.bf16.msra.mxu0 %v1666
    %1739 = vmatpush.bf16.msra.mxu0 %v1662
    %1740 = vmatpush.bf16.msra.mxu0 %v1658
    %1741 = vmatpush.bf16.msra.mxu0 %v1654
    %1742 = vmatpush.bf16.msra.mxu0 %v1650
    %1743 = vmatpush.bf16.msra.mxu0 %v1646
    %1744 = vmatpush.bf16.msra.mxu0 %v1642
    %1745 = vmatpush.bf16.msra.mxu0 %v1638
    %1746 = vmatmul.bf16.gmra.mxu0 %v1506
    %v1747 = vpop.f32.mrf.mxu0
    %v1748 = vadd.f32 0.0, %v1747
    %v1749 = vpop.f32.mrf.mxu0
    %1750 = vdwg.mxu0
    %v1751 = vmax.f32 %v1709, %v1722
    %v1752 = vmax.f32 %v1735, %v1748
    %v1753 = vmax.f32 %v1751, %v1752
    %1754 = vmax.xlane.f32.xlu0 %v1753
    %v1755 = vpop.xlane.xlu0 %1754
    %v1756 = vsub.f32 %v1709, %v1755
    %v1757 = vsub.f32 %v1722, %v1755
    %v1758 = vsub.f32 %v1735, %v1755
    %v1759 = vsub.f32 %v1748, %v1755
    %v1760 = vmul.f32 %v1756, 1.442695
    %v1761 = vpow.pop %v1760
    %v1762 = vmul.f32 %v1757, 1.442695
    %v1763 = vpow.pop %v1762
    %v1764 = vmul.f32 %v1758, 1.442695
    %v1765 = vpow.pop %v1764
    %v1766 = vmul.f32 %v1759, 1.442695
    %v1767 = vpow.pop %v1766
    %v1768 = vadd.f32 %v1761, %v1763
    %v1769 = vadd.f32 %v1768, %v1765
    %v1770 = vadd.f32 %v1769, %v1767
    %1771 = vadd.xlane.f32.xlu0 %v1770
    %v1772 = vpop.xlane.xlu0 %1771
    %v1773 = vlog2.pop %v1772
    %v1774 = vmul.f32 %v1773, 0.6931472
    %v1775 = vsub.f32 %v1756, %v1774
    %v1776 = vsub.f32 %v1757, %v1774
    %v1777 = vsub.f32 %v1758, %v1774
    %v1778 = vsub.f32 %v1759, %v1774
    %1779 = vst [vmem:[#allocation11] sm:$0xff] %v1775
    %1780 = vst [vmem:[#allocation11 + $0x8] sm:$0xff] %v1776
    %1781 = vst [vmem:[#allocation11 + $0x10] sm:$0xff] %v1777
    %1782 = vst [vmem:[#allocation11 + $0x18] sm:$0xff] %v1778
    // Predicated region
    $region66: #{nplm_forward.1} parent=1 // pred_check
      _
    $region67: #{nplm_forward.1} parent=1 // pred_check_branch
      %1784 = sbr.rel (0) target = $region69
    $region68: #{nplm_forward.1} parent=1 // pred_region
      %1786 = vsyncadd [#allocation4], 0
      %s1788 = sshll.u32 [#allocation11], 4
      %s1789 = int_to_ptr.vmem [resolvable:$true] %s1788
      %s1790 = sshll.u32 %s11, 4
      %s1791 = int_to_ptr.hbm [resolvable:$true] %s1790
      %1793 = dma.vmem_to_hbm [thread:$0]  %s1789, 512, %s1791, [#allocation4]
    $region69: #{nplm_forward.1} parent=1 // pred_fallthru
      _
    // Predicated region
    $region70: #{nplm_forward.1} parent=1 // pred_check
      _
    $region71: #{nplm_forward.1} parent=1 // pred_check_branch
      %1795 = sbr.rel (0) target = $region73
    $region72: #{nplm_forward.1} parent=1 // pred_region
      %1797 = dma.done [#allocation4], 512
    $region73: #{nplm_forward.1} parent=1 // pred_fallthru
      _
    %1798 = vsyncpa [#allocation3], 1
    %1799 = vsyncpa [#allocation6], 1
    %1800 = vsyncpa [#allocation9], 1
    %1801 = vsyncpa [#allocation4], 1

</llo_original>
